<compile_context>
chip_gen: v5e
topology: v5e:2x2
jax: 0.10.0
libtpu: 0.0.40
codegen_flags: <defaults>
</compile_context>

<pallas_src>
import jax
import jax.numpy as jnp
from jax.experimental import pallas as pl
from jax.experimental.pallas import tpu as pltpu


C_INS = [8, 16, 32]
C_OUTS = [8]
NEG_INF = -1e30           # -inf stand-in for the maxpool padding ring


def _silu(y):
    # SiLU: exp goes to the EUP, approx reciprocal also lands on the EUP (frees VALU slots).
    return y * pl.reciprocal(1.0 + jnp.exp(-y), approx=True)


# ----------------------------- fused per-level kernel ------------------------------------

def _make_level_kernel(*, Wp, Mp, has_skip, has_pw, has_carry, shortcut):
    """Build the fused kernel for one pyramid level (one batch image per grid step).

    Ref order:
      inputs : x, [pooled], mask, [pw_w, pw_b], cv1_w, cv1_b, cv2_w, cv2_b
      outputs: out, [carry]
      scratch: h_scr, [p_scr]

    Layout: every activation is (C, Mp) with Mp = (H+2)*(W+2) padded spatial positions on the
    lane axis.  3x3 neighborhoods are read as statically shifted windows of a VMEM scratch that
    holds the activation at lane offset B (halo room on both sides), so no HBM im2col is needed.
    """
    B = 128                                                    # aligned scratch base offset
    offs = [dy * Wp + dx for dy in (-1, 0, 1) for dx in (-1, 0, 1)]   # centered 3x3 taps

    def kernel(*refs):
        it = iter(refs)
        x_ref = next(it)
        pooled_ref = next(it) if has_skip else None
        mask_ref = next(it)
        pw_w_ref = next(it) if has_pw else None
        pw_b_ref = next(it) if has_pw else None
        cv1_w_ref = next(it)
        cv1_b_ref = next(it)
        cv2_w_ref = next(it)
        cv2_b_ref = next(it)
        out_ref = next(it)
        carry_ref = next(it) if has_carry else None
        h_scr = next(it)
        p_scr = next(it) if has_carry else None

        m = mask_ref[...]                                      # (1, Mp), 1 = interior pixel
        x = x_ref[0].astype(jnp.float32)                       # (Cx, Mp)
        if has_skip:                                           # MaxPool2d(3,2,1)(carry) + xs[i]
            x = x + pooled_ref[0].astype(jnp.float32)

        if has_pw:                                             # bottomup[i] = PWConv (1x1+BN+SiLU)
            y = jnp.dot(pw_w_ref[...], x.astype(jnp.bfloat16),
                        preferred_element_type=jnp.float32)
            x = _silu(y + pw_b_ref[...])                       # (Cc, Mp) f32

        if has_carry:
            # Dense 3x3 / stride-1 max of the carry; the next level's wrapper only subsamples
            # it with stride 2, which together is exactly MaxPool2d(3, stride=2, padding=1).
            p_scr[:, pl.ds(B, Mp)] = jnp.where(m > 0.5, x, NEG_INF)    # -inf padding ring
            dense = p_scr[:, pl.ds(B + offs[0], Mp)]
            for off in offs[1:]:
                dense = jnp.maximum(dense, p_scr[:, pl.ds(B + off, Mp)])
            carry_ref[0] = dense.astype(carry_ref.dtype)

        # Bottleneck: cv1 (1x1) -> cv2 (3x3, zero padding) [+ residual]
        h = _silu(jnp.dot(cv1_w_ref[...], x.astype(jnp.bfloat16),
                          preferred_element_type=jnp.float32) + cv1_b_ref[...])
        h = h * m                                              # zero the ring == conv zero-pad
        h_scr[:, pl.ds(B, Mp)] = h
        acc = jnp.zeros(out_ref.shape[1:], jnp.float32)        # (cout, Mp)
        for t, off in enumerate(offs):                         # in-kernel im2col: 9 shifted matmuls
            acc = acc + jnp.dot(cv2_w_ref[t], h_scr[:, pl.ds(B + off, Mp)],
                                preferred_element_type=jnp.float32)
        y = _silu(acc + cv2_b_ref[...])
        if shortcut:                                           # Bottleneck residual
            y = y + x
        out_ref[0] = y.astype(out_ref.dtype)

    return kernel


def _run_level(x_pf, pooled_pf, mask, pw, cv1, cv2, *, has_carry, shortcut,
               Wp, cout, n_hidden, c_carry):
    """One fused pallas_call for one pyramid level; grid = (batch,), 'parallel'."""
    N, Cx, Mp = x_pf.shape
    has_skip = pooled_pf is not None
    has_pw = pw is not None

    kernel = _make_level_kernel(Wp=Wp, Mp=Mp, has_skip=has_skip, has_pw=has_pw,
                                has_carry=has_carry, shortcut=shortcut)

    def img_spec(c):
        return pl.BlockSpec((1, c, Mp), lambda n: (n, 0, 0))

    def full_spec(shape):
        nd = len(shape)
        return pl.BlockSpec(shape, lambda n: (0,) * nd)

    in_specs = [img_spec(Cx)]
    args = [x_pf]
    if has_skip:
        in_specs.append(img_spec(Cx))
        args.append(pooled_pf)
    in_specs.append(full_spec(mask.shape))
    args.append(mask)
    if has_pw:
        in_specs += [full_spec(pw[0].shape), full_spec(pw[1].shape)]
        args += [pw[0], pw[1]]
    in_specs += [full_spec(cv1[0].shape), full_spec(cv1[1].shape),
                 full_spec(cv2[0].shape), full_spec(cv2[1].shape)]
    args += [cv1[0], cv1[1], cv2[0], cv2[1]]

    out_shape = [jax.ShapeDtypeStruct((N, cout, Mp), jnp.float32)]
    out_specs = [img_spec(cout)]
    if has_carry:
        out_shape.append(jax.ShapeDtypeStruct((N, c_carry, Mp), jnp.bfloat16))
        out_specs.append(img_spec(c_carry))

    scratch_shapes = [pltpu.VMEM((n_hidden, Mp + 256), jnp.float32)]   # halo'd cv2 input
    if has_carry:
        scratch_shapes.append(pltpu.VMEM((c_carry, Mp + 256), jnp.float32))  # halo'd pool input

    outs = pl.pallas_call(
        kernel,
        grid=(N,),
        in_specs=in_specs,
        out_specs=tuple(out_specs) if has_carry else out_specs[0],
        out_shape=tuple(out_shape) if has_carry else out_shape[0],
        scratch_shapes=scratch_shapes,
        compiler_params=pltpu.CompilerParams(
            dimension_semantics=("parallel",),            # batch images are independent
            vmem_limit_bytes=32 * 1024 * 1024),           # explicit budget (v7x-safe)
    )(*args)
    if has_carry:
        return outs[0], outs[1]
    return outs, None


# ----------------------------- wrapper-side layout glue -----------------------------------

def _pad_flat(x_nchw):
    """NCHW -> zero-pad spatial by 1 -> (N, C, (H+2)*(W+2)).  Pure layout glue, no transpose."""
    n, c, h, w = x_nchw.shape
    xp = jnp.pad(x_nchw, ((0, 0), (0, 0), (1, 1), (1, 1)))
    return xp.reshape(n, c, (h + 2) * (w + 2))


def _interior_mask(h, w):
    m = jnp.zeros((h + 2, w + 2), jnp.float32)
    m = m.at[1:h + 1, 1:w + 1].set(1.0)
    return m.reshape(1, (h + 2) * (w + 2))


def _fold_1x1(p):
    """Fold BN scale into the 1x1 conv weight; return (w^T bf16 (Cout,Cin), bias f32 (Cout,1))."""
    w = (p["w"] * p["s"][None, :]).T.astype(jnp.bfloat16)
    b = p["b"].reshape(-1, 1).astype(jnp.float32)
    return w, b


def _fold_3x3(p):
    """Fold BN scale; return (w bf16 (9, Cout, Cin) per-tap transposed, bias f32 (Cout,1))."""
    w = p["w"] * p["s"][None, None, None, :]                   # (3, 3, Cin, Cout)
    cin, cout = w.shape[2], w.shape[3]
    w = jnp.transpose(w, (0, 1, 3, 2)).reshape(9, cout, cin).astype(jnp.bfloat16)
    b = p["b"].reshape(-1, 1).astype(jnp.float32)
    return w, b


# ----------------------------- module assembly --------------------------------------------

def init_params(key, c_ins=C_INS, c_outs=C_OUTS):
    num_in = len(c_ins)
    cout0 = c_outs[0]
    hidden = cout0 // 2                            # Bottleneck expansion e = 0.5

    def conv_p(k, cin, cout, ksize):
        k1, k2, k3 = jax.random.split(k, 3)
        shape = (cin, cout) if ksize == 1 else (3, 3, cin, cout)
        fan_in = cin * ksize * ksize
        w = jax.random.normal(k1, shape, jnp.float32) / jnp.sqrt(float(fan_in))
        s = 0.5 + jax.random.uniform(k2, (cout,), jnp.float32)   # folded-BN scale
        b = 0.1 * jax.random.normal(k3, (cout,), jnp.float32)    # folded-BN bias
        return {"w": w, "s": s, "b": b}

    params = {"bottomup": [None] * num_in, "add_convs": [None] * num_in}
    keys = jax.random.split(key, 3 * num_in)
    for i in range(num_in):
        if i == 0:
            params["bottomup"][i] = None                         # nn.Identity
            bneck_cin = c_ins[0]
        else:
            params["bottomup"][i] = conv_p(keys[3 * i], c_ins[i], c_ins[i - 1], 1)
            bneck_cin = c_ins[i - 1]
        params["add_convs"][i] = {
            "cv1": conv_p(keys[3 * i + 1], bneck_cin, hidden, 1),
            "cv2": conv_p(keys[3 * i + 2], hidden, cout0, 3),
            "shortcut": bneck_cin == cout0,
        }
    return params


def bottom_up_agg(xs_nchw, params, c_outs=C_OUTS):
    """BottomUpAgg(use_concat=False).forward.  xs_nchw[i]: (N, c_ins[i], H_i, W_i) with spatial
    resolution doubling in i; xs[-1] is processed first (like xs.pop()).  Returns NCHW outputs."""
    cout = c_outs[0]
    n_hidden = cout // 2
    num = len(xs_nchw)
    outputs = []
    carry = None    # (dense 3x3/stride-1 max of the running carry, (Hp_prev, Wp_prev))

    for i in reversed(range(num)):
        n, cx, h, w = xs_nchw[i].shape
        hp, wp = h + 2, w + 2
        x_pf = _pad_flat(xs_nchw[i].astype(jnp.bfloat16))        # (N, Cx, Hp*Wp) bf16
        mask = _interior_mask(h, w)                              # (1, Hp*Wp) f32

        if carry is None:
            pooled_pf = None                                     # first level: x = xs.pop()
        else:
            dense, (hp_prev, wp_prev) = carry
            d = dense.reshape(n, cx, hp_prev, wp_prev)
            # stride-2 subsample of the in-kernel dense 3x3 max == MaxPool2d(3, 2, 1)(carry)
            # (thin XLA slice/pad glue; the 9-tap max itself already ran inside the kernel)
            pooled = d[:, :, 1:2 * h + 1:2, 1:2 * w + 1:2]       # (N, Cx, H, W)
            pooled_pf = _pad_flat(pooled)

        pw = None
        c_carry = 0
        if i > 0:
            pw = _fold_1x1(params["bottomup"][i])                # c_ins[i] -> c_ins[i-1]
            c_carry = pw[0].shape[0]
        bn = params["add_convs"][i]
        cv1 = _fold_1x1(bn["cv1"])
        cv2 = _fold_3x3(bn["cv2"])

        out_pf, dense_next = _run_level(
            x_pf, pooled_pf, mask, pw, cv1, cv2,
            has_carry=(i > 0), shortcut=bool(bn["shortcut"]),
            Wp=wp, cout=cout, n_hidden=n_hidden, c_carry=c_carry)

        out = out_pf.reshape(n, cout, hp, wp)[:, :, 1:h + 1, 1:w + 1]   # un-pad -> NCHW
        outputs.append(out)
        carry = None if dense_next is None else (dense_next, (hp, wp))
    return outputs


if __name__ == "__main__":
    key = jax.random.PRNGKey(0)
    kp, k0, k1, k2 = jax.random.split(key, 4)
    params = init_params(kp)

    N = 2
    xs = [
        jax.random.normal(k0, (N, C_INS[0], 4, 4), jnp.float32),
        jax.random.normal(k1, (N, C_INS[1], 8, 8), jnp.float32),
        jax.random.normal(k2, (N, C_INS[2], 16, 16), jnp.float32),
    ]

    outs = bottom_up_agg(xs, params)
    outs = jax.block_until_ready(outs)

    expected = [(N, C_OUTS[0], 16, 16), (N, C_OUTS[0], 8, 8), (N, C_OUTS[0], 4, 4)]
    assert [tuple(o.shape) for o in outs] == expected, [o.shape for o in outs]
    assert all(bool(jnp.all(jnp.isfinite(o))) for o in outs)
    print("KERNEL_OK")
</pallas_src>

<mosaic_0001>
module attributes {stable_mosaic.version = 11 : i64} {
  func.func @kernel(%arg0: i32, %arg1: memref<1x32x324xbf16, #tpu.memory_space<vmem>>, %arg2: memref<1x324xf32, #tpu.memory_space<vmem>>, %arg3: memref<16x32xbf16, #tpu.memory_space<vmem>>, %arg4: memref<16x1xf32, #tpu.memory_space<vmem>>, %arg5: memref<4x16xbf16, #tpu.memory_space<vmem>>, %arg6: memref<4x1xf32, #tpu.memory_space<vmem>>, %arg7: memref<9x8x4xbf16, #tpu.memory_space<vmem>>, %arg8: memref<8x1xf32, #tpu.memory_space<vmem>>, %arg9: memref<1x8x324xf32, #tpu.memory_space<vmem>>, %arg10: memref<1x16x324xbf16, #tpu.memory_space<vmem>>, %arg11: memref<4x580xf32, #tpu.memory_space<vmem>>, %arg12: memref<16x580xf32, #tpu.memory_space<vmem>>) attributes {dimension_semantics = [#tpu.dimension_semantics<parallel>], iteration_bounds = array<i64: 2>, scalar_prefetch = 0 : i64, scratch_operands = 2 : i64, tpu.core_type = #tpu.core_type<tc>, window_params = [{transform_indices = @transform_0, window_bounds = array<i64: 1, 32, 324>}, {pipeline_mode = #tpu.pipeline_mode<synchronous>, transform_indices = @transform_1, window_bounds = array<i64: 1, 324>}, {pipeline_mode = #tpu.pipeline_mode<synchronous>, transform_indices = @transform_2, window_bounds = array<i64: 16, 32>}, {pipeline_mode = #tpu.pipeline_mode<synchronous>, transform_indices = @transform_3, window_bounds = array<i64: 16, 1>}, {pipeline_mode = #tpu.pipeline_mode<synchronous>, transform_indices = @transform_4, window_bounds = array<i64: 4, 16>}, {pipeline_mode = #tpu.pipeline_mode<synchronous>, transform_indices = @transform_5, window_bounds = array<i64: 4, 1>}, {pipeline_mode = #tpu.pipeline_mode<synchronous>, transform_indices = @transform_6, window_bounds = array<i64: 9, 8, 4>}, {pipeline_mode = #tpu.pipeline_mode<synchronous>, transform_indices = @transform_7, window_bounds = array<i64: 8, 1>}, {transform_indices = @transform_8, window_bounds = array<i64: 1, 8, 324>}, {transform_indices = @transform_9, window_bounds = array<i64: 1, 16, 324>}]} {
    %c0 = arith.constant 0 : index
    %c0_0 = arith.constant 0 : index
    %0 = vector.load %arg2[%c0, %c0_0] : memref<1x324xf32, #tpu.memory_space<vmem>>, vector<1x324xf32>
    %c0_1 = arith.constant 0 : index
    %c0_2 = arith.constant 0 : index
    %c0_3 = arith.constant 0 : index
    %1 = vector.load %arg1[%c0_1, %c0_2, %c0_3] : memref<1x32x324xbf16, #tpu.memory_space<vmem>>, vector<1x32x324xbf16>
    %2 = vector.shape_cast %1 : vector<1x32x324xbf16> to vector<32x324xbf16>
    %3 = arith.extf %2 : vector<32x324xbf16> to vector<32x324xf32>
    %c0_4 = arith.constant 0 : index
    %c0_5 = arith.constant 0 : index
    %4 = vector.load %arg3[%c0_4, %c0_5] : memref<16x32xbf16, #tpu.memory_space<vmem>>, vector<16x32xbf16>
    %5 = arith.truncf %3 : vector<32x324xf32> to vector<32x324xbf16>
    %cst = arith.constant dense<0.000000e+00> : vector<16x324xf32>
    %6 = tpu.matmul %4, %5, %cst {dimension_numbers = #tpu.dot_dimension_numbers<[1], [0], [0], [1], [0, 0, 1, 1], [], []>} : vector<16x32xbf16>, vector<32x324xbf16>, vector<16x324xf32> -> vector<16x324xf32>
    %c0_6 = arith.constant 0 : index
    %c0_7 = arith.constant 0 : index
    %7 = vector.load %arg4[%c0_6, %c0_7] : memref<16x1xf32, #tpu.memory_space<vmem>>, vector<16x1xf32>
    %8 = vector.broadcast %7 : vector<16x1xf32> to vector<16x324xf32>
    %9 = arith.addf %6, %8 : vector<16x324xf32>
    %cst_8 = arith.constant 0.000000e+00 : f32
    %10 = vector.broadcast %cst_8 : f32 to vector<16x324xf32>
    %11 = arith.subf %10, %9 : vector<16x324xf32>
    %12 = math.exp %11 : vector<16x324xf32>
    %cst_9 = arith.constant 1.000000e+00 : f32
    %13 = vector.broadcast %cst_9 : f32 to vector<16x324xf32>
    %14 = arith.addf %13, %12 : vector<16x324xf32>
    %15 = tpu.reciprocal %14 {approx = true} : vector<16x324xf32> -> vector<16x324xf32>
    %16 = arith.mulf %9, %15 : vector<16x324xf32>
    %cst_10 = arith.constant 5.000000e-01 : f32
    %17 = vector.broadcast %cst_10 : f32 to vector<1x324xf32>
    %18 = arith.cmpf ogt, %0, %17 : vector<1x324xf32>
    %cst_11 = arith.constant -1.000000e+30 : f32
    %19 = vector.shape_cast %18 : vector<1x324xi1> to vector<1x324xi1>
    %20 = vector.broadcast %19 : vector<1x324xi1> to vector<16x324xi1>
    %21 = vector.broadcast %cst_11 : f32 to vector<16x324xf32>
    %22 = arith.select %20, %16, %21 : vector<16x324xi1>, vector<16x324xf32>
    %c0_12 = arith.constant 0 : index
    %c128 = arith.constant 128 : index
    %23 = vector.load %arg12[%c0_12, %c128] : memref<16x580xf32, #tpu.memory_space<vmem>>, vector<16x324xf32>
    tpu.vector_store %arg12[%c0_12, %c128], %22 {strides = array<i32>} : memref<16x580xf32, #tpu.memory_space<vmem>>, vector<16x324xf32>,
    %c0_13 = arith.constant 0 : index
    %c109 = arith.constant 109 : index
    %24 = vector.load %arg12[%c0_13, %c109] : memref<16x580xf32, #tpu.memory_space<vmem>>, vector<16x324xf32>
    %c0_14 = arith.constant 0 : index
    %c110 = arith.constant 110 : index
    %25 = vector.load %arg12[%c0_14, %c110] : memref<16x580xf32, #tpu.memory_space<vmem>>, vector<16x324xf32>
    %26 = arith.maximumf %24, %25 : vector<16x324xf32>
    %c0_15 = arith.constant 0 : index
    %c111 = arith.constant 111 : index
    %27 = vector.load %arg12[%c0_15, %c111] : memref<16x580xf32, #tpu.memory_space<vmem>>, vector<16x324xf32>
    %28 = arith.maximumf %26, %27 : vector<16x324xf32>
    %c0_16 = arith.constant 0 : index
    %c127 = arith.constant 127 : index
    %29 = vector.load %arg12[%c0_16, %c127] : memref<16x580xf32, #tpu.memory_space<vmem>>, vector<16x324xf32>
    %30 = arith.maximumf %28, %29 : vector<16x324xf32>
    %c0_17 = arith.constant 0 : index
    %c128_18 = arith.constant 128 : index
    %31 = vector.load %arg12[%c0_17, %c128_18] : memref<16x580xf32, #tpu.memory_space<vmem>>, vector<16x324xf32>
    %32 = arith.maximumf %30, %31 : vector<16x324xf32>
    %c0_19 = arith.constant 0 : index
    %c129 = arith.constant 129 : index
    %33 = vector.load %arg12[%c0_19, %c129] : memref<16x580xf32, #tpu.memory_space<vmem>>, vector<16x324xf32>
    %34 = arith.maximumf %32, %33 : vector<16x324xf32>
    %c0_20 = arith.constant 0 : index
    %c145 = arith.constant 145 : index
    %35 = vector.load %arg12[%c0_20, %c145] : memref<16x580xf32, #tpu.memory_space<vmem>>, vector<16x324xf32>
    %36 = arith.maximumf %34, %35 : vector<16x324xf32>
    %c0_21 = arith.constant 0 : index
    %c146 = arith.constant 146 : index
    %37 = vector.load %arg12[%c0_21, %c146] : memref<16x580xf32, #tpu.memory_space<vmem>>, vector<16x324xf32>
    %38 = arith.maximumf %36, %37 : vector<16x324xf32>
    %c0_22 = arith.constant 0 : index
    %c147 = arith.constant 147 : index
    %39 = vector.load %arg12[%c0_22, %c147] : memref<16x580xf32, #tpu.memory_space<vmem>>, vector<16x324xf32>
    %40 = arith.maximumf %38, %39 : vector<16x324xf32>
    %41 = arith.truncf %40 : vector<16x324xf32> to vector<16x324xbf16>
    %c0_23 = arith.constant 0 : index
    %c0_24 = arith.constant 0 : index
    %c0_25 = arith.constant 0 : index
    %42 = vector.load %arg10[%c0_23, %c0_24, %c0_25] : memref<1x16x324xbf16, #tpu.memory_space<vmem>>, vector<1x16x324xbf16>
    %43 = vector.shape_cast %42 : vector<1x16x324xbf16> to vector<16x324xbf16>
    %44 = vector.shape_cast %41 : vector<16x324xbf16> to vector<1x16x324xbf16>
    tpu.vector_store %arg10[%c0_23, %c0_24, %c0_25], %44 {strides = array<i32>} : memref<1x16x324xbf16, #tpu.memory_space<vmem>>, vector<1x16x324xbf16>,
    %c0_26 = arith.constant 0 : index
    %c0_27 = arith.constant 0 : index
    %45 = vector.load %arg5[%c0_26, %c0_27] : memref<4x16xbf16, #tpu.memory_space<vmem>>, vector<4x16xbf16>
    %46 = arith.truncf %16 : vector<16x324xf32> to vector<16x324xbf16>
    %cst_28 = arith.constant dense<0.000000e+00> : vector<4x324xf32>
    %47 = tpu.matmul %45, %46, %cst_28 {dimension_numbers = #tpu.dot_dimension_numbers<[1], [0], [0], [1], [0, 0, 1, 1], [], []>} : vector<4x16xbf16>, vector<16x324xbf16>, vector<4x324xf32> -> vector<4x324xf32>
    %c0_29 = arith.constant 0 : index
    %c0_30 = arith.constant 0 : index
    %48 = vector.load %arg6[%c0_29, %c0_30] : memref<4x1xf32, #tpu.memory_space<vmem>>, vector<4x1xf32>
    %49 = vector.broadcast %48 : vector<4x1xf32> to vector<4x324xf32>
    %50 = arith.addf %47, %49 : vector<4x324xf32>
    %cst_31 = arith.constant 0.000000e+00 : f32
    %51 = vector.broadcast %cst_31 : f32 to vector<4x324xf32>
    %52 = arith.subf %51, %50 : vector<4x324xf32>
    %53 = math.exp %52 : vector<4x324xf32>
    %cst_32 = arith.constant 1.000000e+00 : f32
    %54 = vector.broadcast %cst_32 : f32 to vector<4x324xf32>
    %55 = arith.addf %54, %53 : vector<4x324xf32>
    %56 = tpu.reciprocal %55 {approx = true} : vector<4x324xf32> -> vector<4x324xf32>
    %57 = arith.mulf %50, %56 : vector<4x324xf32>
    %58 = vector.broadcast %0 : vector<1x324xf32> to vector<4x324xf32>
    %59 = arith.mulf %57, %58 : vector<4x324xf32>
    %c0_33 = arith.constant 0 : index
    %c128_34 = arith.constant 128 : index
    %60 = vector.load %arg11[%c0_33, %c128_34] : memref<4x580xf32, #tpu.memory_space<vmem>>, vector<4x324xf32>
    tpu.vector_store %arg11[%c0_33, %c128_34], %59 {strides = array<i32>} : memref<4x580xf32, #tpu.memory_space<vmem>>, vector<4x324xf32>,
    %cst_35 = arith.constant 0.000000e+00 : f32
    %61 = vector.broadcast %cst_35 : f32 to vector<8x324xf32>
    %c0_36 = arith.constant 0 : index
    %c0_37 = arith.constant 0 : index
    %c0_38 = arith.constant 0 : index
    %62 = vector.load %arg7[%c0_36, %c0_37, %c0_38] : memref<9x8x4xbf16, #tpu.memory_space<vmem>>, vector<1x8x4xbf16>
    %63 = vector.shape_cast %62 : vector<1x8x4xbf16> to vector<8x4xbf16>
    %c0_39 = arith.constant 0 : index
    %c109_40 = arith.constant 109 : index
    %64 = vector.load %arg11[%c0_39, %c109_40] : memref<4x580xf32, #tpu.memory_space<vmem>>, vector<4x324xf32>
    %cst_41 = arith.constant dense<0.000000e+00> : vector<8x324xf32>
    %65 = tpu.matmul %63, %64, %cst_41 {dimension_numbers = #tpu.dot_dimension_numbers<[1], [0], [0], [1], [0, 0, 1, 1], [], []>} : vector<8x4xbf16>, vector<4x324xf32>, vector<8x324xf32> -> vector<8x324xf32>
    %66 = arith.addf %61, %65 : vector<8x324xf32>
    %c1 = arith.constant 1 : index
    %c0_42 = arith.constant 0 : index
    %c0_43 = arith.constant 0 : index
    %67 = vector.load %arg7[%c1, %c0_42, %c0_43] : memref<9x8x4xbf16, #tpu.memory_space<vmem>>, vector<1x8x4xbf16>
    %68 = vector.shape_cast %67 : vector<1x8x4xbf16> to vector<8x4xbf16>
    %c0_44 = arith.constant 0 : index
    %c110_45 = arith.constant 110 : index
    %69 = vector.load %arg11[%c0_44, %c110_45] : memref<4x580xf32, #tpu.memory_space<vmem>>, vector<4x324xf32>
    %cst_46 = arith.constant dense<0.000000e+00> : vector<8x324xf32>
    %70 = tpu.matmul %68, %69, %cst_46 {dimension_numbers = #tpu.dot_dimension_numbers<[1], [0], [0], [1], [0, 0, 1, 1], [], []>} : vector<8x4xbf16>, vector<4x324xf32>, vector<8x324xf32> -> vector<8x324xf32>
    %71 = arith.addf %66, %70 : vector<8x324xf32>
    %c2 = arith.constant 2 : index
    %c0_47 = arith.constant 0 : index
    %c0_48 = arith.constant 0 : index
    %72 = vector.load %arg7[%c2, %c0_47, %c0_48] : memref<9x8x4xbf16, #tpu.memory_space<vmem>>, vector<1x8x4xbf16>
    %73 = vector.shape_cast %72 : vector<1x8x4xbf16> to vector<8x4xbf16>
    %c0_49 = arith.constant 0 : index
    %c111_50 = arith.constant 111 : index
    %74 = vector.load %arg11[%c0_49, %c111_50] : memref<4x580xf32, #tpu.memory_space<vmem>>, vector<4x324xf32>
    %cst_51 = arith.constant dense<0.000000e+00> : vector<8x324xf32>
    %75 = tpu.matmul %73, %74, %cst_51 {dimension_numbers = #tpu.dot_dimension_numbers<[1], [0], [0], [1], [0, 0, 1, 1], [], []>} : vector<8x4xbf16>, vector<4x324xf32>, vector<8x324xf32> -> vector<8x324xf32>
    %76 = arith.addf %71, %75 : vector<8x324xf32>
    %c3 = arith.constant 3 : index
    %c0_52 = arith.constant 0 : index
    %c0_53 = arith.constant 0 : index
    %77 = vector.load %arg7[%c3, %c0_52, %c0_53] : memref<9x8x4xbf16, #tpu.memory_space<vmem>>, vector<1x8x4xbf16>
    %78 = vector.shape_cast %77 : vector<1x8x4xbf16> to vector<8x4xbf16>
    %c0_54 = arith.constant 0 : index
    %c127_55 = arith.constant 127 : index
    %79 = vector.load %arg11[%c0_54, %c127_55] : memref<4x580xf32, #tpu.memory_space<vmem>>, vector<4x324xf32>
    %cst_56 = arith.constant dense<0.000000e+00> : vector<8x324xf32>
    %80 = tpu.matmul %78, %79, %cst_56 {dimension_numbers = #tpu.dot_dimension_numbers<[1], [0], [0], [1], [0, 0, 1, 1], [], []>} : vector<8x4xbf16>, vector<4x324xf32>, vector<8x324xf32> -> vector<8x324xf32>
    %81 = arith.addf %76, %80 : vector<8x324xf32>
    %c4 = arith.constant 4 : index
    %c0_57 = arith.constant 0 : index
    %c0_58 = arith.constant 0 : index
    %82 = vector.load %arg7[%c4, %c0_57, %c0_58] : memref<9x8x4xbf16, #tpu.memory_space<vmem>>, vector<1x8x4xbf16>
    %83 = vector.shape_cast %82 : vector<1x8x4xbf16> to vector<8x4xbf16>
    %c0_59 = arith.constant 0 : index
    %c128_60 = arith.constant 128 : index
    %84 = vector.load %arg11[%c0_59, %c128_60] : memref<4x580xf32, #tpu.memory_space<vmem>>, vector<4x324xf32>
    %cst_61 = arith.constant dense<0.000000e+00> : vector<8x324xf32>
    %85 = tpu.matmul %83, %84, %cst_61 {dimension_numbers = #tpu.dot_dimension_numbers<[1], [0], [0], [1], [0, 0, 1, 1], [], []>} : vector<8x4xbf16>, vector<4x324xf32>, vector<8x324xf32> -> vector<8x324xf32>
    %86 = arith.addf %81, %85 : vector<8x324xf32>
    %c5 = arith.constant 5 : index
    %c0_62 = arith.constant 0 : index
    %c0_63 = arith.constant 0 : index
    %87 = vector.load %arg7[%c5, %c0_62, %c0_63] : memref<9x8x4xbf16, #tpu.memory_space<vmem>>, vector<1x8x4xbf16>
    %88 = vector.shape_cast %87 : vector<1x8x4xbf16> to vector<8x4xbf16>
    %c0_64 = arith.constant 0 : index
    %c129_65 = arith.constant 129 : index
    %89 = vector.load %arg11[%c0_64, %c129_65] : memref<4x580xf32, #tpu.memory_space<vmem>>, vector<4x324xf32>
    %cst_66 = arith.constant dense<0.000000e+00> : vector<8x324xf32>
    %90 = tpu.matmul %88, %89, %cst_66 {dimension_numbers = #tpu.dot_dimension_numbers<[1], [0], [0], [1], [0, 0, 1, 1], [], []>} : vector<8x4xbf16>, vector<4x324xf32>, vector<8x324xf32> -> vector<8x324xf32>
    %91 = arith.addf %86, %90 : vector<8x324xf32>
    %c6 = arith.constant 6 : index
    %c0_67 = arith.constant 0 : index
    %c0_68 = arith.constant 0 : index
    %92 = vector.load %arg7[%c6, %c0_67, %c0_68] : memref<9x8x4xbf16, #tpu.memory_space<vmem>>, vector<1x8x4xbf16>
    %93 = vector.shape_cast %92 : vector<1x8x4xbf16> to vector<8x4xbf16>
    %c0_69 = arith.constant 0 : index
    %c145_70 = arith.constant 145 : index
    %94 = vector.load %arg11[%c0_69, %c145_70] : memref<4x580xf32, #tpu.memory_space<vmem>>, vector<4x324xf32>
    %cst_71 = arith.constant dense<0.000000e+00> : vector<8x324xf32>
    %95 = tpu.matmul %93, %94, %cst_71 {dimension_numbers = #tpu.dot_dimension_numbers<[1], [0], [0], [1], [0, 0, 1, 1], [], []>} : vector<8x4xbf16>, vector<4x324xf32>, vector<8x324xf32> -> vector<8x324xf32>
    %96 = arith.addf %91, %95 : vector<8x324xf32>
    %c7 = arith.constant 7 : index
    %c0_72 = arith.constant 0 : index
    %c0_73 = arith.constant 0 : index
    %97 = vector.load %arg7[%c7, %c0_72, %c0_73] : memref<9x8x4xbf16, #tpu.memory_space<vmem>>, vector<1x8x4xbf16>
    %98 = vector.shape_cast %97 : vector<1x8x4xbf16> to vector<8x4xbf16>
    %c0_74 = arith.constant 0 : index
    %c146_75 = arith.constant 146 : index
    %99 = vector.load %arg11[%c0_74, %c146_75] : memref<4x580xf32, #tpu.memory_space<vmem>>, vector<4x324xf32>
    %cst_76 = arith.constant dense<0.000000e+00> : vector<8x324xf32>
    %100 = tpu.matmul %98, %99, %cst_76 {dimension_numbers = #tpu.dot_dimension_numbers<[1], [0], [0], [1], [0, 0, 1, 1], [], []>} : vector<8x4xbf16>, vector<4x324xf32>, vector<8x324xf32> -> vector<8x324xf32>
    %101 = arith.addf %96, %100 : vector<8x324xf32>
    %c8 = arith.constant 8 : index
    %c0_77 = arith.constant 0 : index
    %c0_78 = arith.constant 0 : index
    %102 = vector.load %arg7[%c8, %c0_77, %c0_78] : memref<9x8x4xbf16, #tpu.memory_space<vmem>>, vector<1x8x4xbf16>
    %103 = vector.shape_cast %102 : vector<1x8x4xbf16> to vector<8x4xbf16>
    %c0_79 = arith.constant 0 : index
    %c147_80 = arith.constant 147 : index
    %104 = vector.load %arg11[%c0_79, %c147_80] : memref<4x580xf32, #tpu.memory_space<vmem>>, vector<4x324xf32>
    %cst_81 = arith.constant dense<0.000000e+00> : vector<8x324xf32>
    %105 = tpu.matmul %103, %104, %cst_81 {dimension_numbers = #tpu.dot_dimension_numbers<[1], [0], [0], [1], [0, 0, 1, 1], [], []>} : vector<8x4xbf16>, vector<4x324xf32>, vector<8x324xf32> -> vector<8x324xf32>
    %106 = arith.addf %101, %105 : vector<8x324xf32>
    %c0_82 = arith.constant 0 : index
    %c0_83 = arith.constant 0 : index
    %107 = vector.load %arg8[%c0_82, %c0_83] : memref<8x1xf32, #tpu.memory_space<vmem>>, vector<8x1xf32>
    %108 = vector.broadcast %107 : vector<8x1xf32> to vector<8x324xf32>
    %109 = arith.addf %106, %108 : vector<8x324xf32>
    %cst_84 = arith.constant 0.000000e+00 : f32
    %110 = vector.broadcast %cst_84 : f32 to vector<8x324xf32>
    %111 = arith.subf %110, %109 : vector<8x324xf32>
    %112 = math.exp %111 : vector<8x324xf32>
    %cst_85 = arith.constant 1.000000e+00 : f32
    %113 = vector.broadcast %cst_85 : f32 to vector<8x324xf32>
    %114 = arith.addf %113, %112 : vector<8x324xf32>
    %115 = tpu.reciprocal %114 {approx = true} : vector<8x324xf32> -> vector<8x324xf32>
    %116 = arith.mulf %109, %115 : vector<8x324xf32>
    %c0_86 = arith.constant 0 : index
    %c0_87 = arith.constant 0 : index
    %c0_88 = arith.constant 0 : index
    %117 = vector.load %arg9[%c0_86, %c0_87, %c0_88] : memref<1x8x324xf32, #tpu.memory_space<vmem>>, vector<1x8x324xf32>
    %118 = vector.shape_cast %117 : vector<1x8x324xf32> to vector<8x324xf32>
    %119 = vector.shape_cast %116 : vector<8x324xf32> to vector<1x8x324xf32>
    tpu.vector_store %arg9[%c0_86, %c0_87, %c0_88], %119 {strides = array<i32>} : memref<1x8x324xf32, #tpu.memory_space<vmem>>, vector<1x8x324xf32>,
    return
  }
  func.func @transform_0(%arg0: i32) -> (i32, i32, i32) {
    %c0_i32 = arith.constant 0 : i32
    %c0_i32_0 = arith.constant 0 : i32
    %c0_i32_1 = arith.constant 0 : i32
    return %arg0, %c0_i32, %c0_i32_0 : i32, i32, i32
  }
  func.func @transform_1(%arg0: i32) -> (i32, i32) {
    %c0_i32 = arith.constant 0 : i32
    %c0_i32_0 = arith.constant 0 : i32
    %c0_i32_1 = arith.constant 0 : i32
    return %c0_i32, %c0_i32_0 : i32, i32
  }
  func.func @transform_2(%arg0: i32) -> (i32, i32) {
    %c0_i32 = arith.constant 0 : i32
    %c0_i32_0 = arith.constant 0 : i32
    %c0_i32_1 = arith.constant 0 : i32
    return %c0_i32, %c0_i32_0 : i32, i32
  }
  func.func @transform_3(%arg0: i32) -> (i32, i32) {
    %c0_i32 = arith.constant 0 : i32
    %c0_i32_0 = arith.constant 0 : i32
    %c0_i32_1 = arith.constant 0 : i32
    return %c0_i32, %c0_i32_0 : i32, i32
  }
  func.func @transform_4(%arg0: i32) -> (i32, i32) {
    %c0_i32 = arith.constant 0 : i32
    %c0_i32_0 = arith.constant 0 : i32
    %c0_i32_1 = arith.constant 0 : i32
    return %c0_i32, %c0_i32_0 : i32, i32
  }
  func.func @transform_5(%arg0: i32) -> (i32, i32) {
    %c0_i32 = arith.constant 0 : i32
    %c0_i32_0 = arith.constant 0 : i32
    %c0_i32_1 = arith.constant 0 : i32
    return %c0_i32, %c0_i32_0 : i32, i32
  }
  func.func @transform_6(%arg0: i32) -> (i32, i32, i32) {
    %c0_i32 = arith.constant 0 : i32
    %c0_i32_0 = arith.constant 0 : i32
    %c0_i32_1 = arith.constant 0 : i32
    %c0_i32_2 = arith.constant 0 : i32
    return %c0_i32, %c0_i32_0, %c0_i32_1 : i32, i32, i32
  }
  func.func @transform_7(%arg0: i32) -> (i32, i32) {
    %c0_i32 = arith.constant 0 : i32
    %c0_i32_0 = arith.constant 0 : i32
    %c0_i32_1 = arith.constant 0 : i32
    return %c0_i32, %c0_i32_0 : i32, i32
  }
  func.func @transform_8(%arg0: i32) -> (i32, i32, i32) {
    %c0_i32 = arith.constant 0 : i32
    %c0_i32_0 = arith.constant 0 : i32
    %c0_i32_1 = arith.constant 0 : i32
    return %arg0, %c0_i32, %c0_i32_0 : i32, i32, i32
  }
  func.func @transform_9(%arg0: i32) -> (i32, i32, i32) {
    %c0_i32 = arith.constant 0 : i32
    %c0_i32_0 = arith.constant 0 : i32
    %c0_i32_1 = arith.constant 0 : i32
    return %arg0, %c0_i32, %c0_i32_0 : i32, i32, i32
  }
}

</mosaic_0001>

<llo_original>
// kernel: tpu_custom_call.1
$region0: #{tpu_custom_call.1}
  #allocation0 [shape = 'u32[]', space=smem, size = 0x4, offset = 0x4, fixed_abs, tag = 'smem constant byte address 0x4 - core index']
  #allocation1 [shape = 'u32[72,128]{1,0:T(1,128)}', space=vmem, size = 0x9000, scoped, tag = 'internal scratch']
  #allocation2 [shape = 'f32[4,580]{1,0:T(4,128)}', space=vmem, size = 0x2800, scoped, tag = 'scratch operand']
  #allocation3 [shape = 'f32[16,580]{1,0:T(8,128)}', space=vmem, size = 0xa000, scoped, tag = 'scratch operand']
  %s0 = inlined_call_operand.hbm [shape: bf16[2,32,324], index: 0, kind: input, shape index: {}]
  %s1 = inlined_call_operand.vmem [shape: f32[1,324], index: 1, kind: input, shape index: {}]
  %s2 = inlined_call_operand.vmem [shape: bf16[16,32], index: 2, kind: input, shape index: {}]
  %s3 = inlined_call_operand.vmem [shape: f32[16,1], index: 3, kind: input, shape index: {}]
  %s4 = inlined_call_operand.vmem [shape: bf16[4,16], index: 4, kind: input, shape index: {}]
  %s5 = inlined_call_operand.vmem [shape: f32[4,1], index: 5, kind: input, shape index: {}]
  %s6 = inlined_call_operand.vmem [shape: bf16[9,8,4], index: 6, kind: input, shape index: {}]
  %s7 = inlined_call_operand.vmem [shape: f32[8,1], index: 7, kind: input, shape index: {}]
  %s8 = inlined_call_operand.hbm [shape: f32[2,8,324], index: 8, kind: output, shape index: {0}]
  %s9 = inlined_call_operand.hbm [shape: bf16[2,16,324], index: 9, kind: output, shape index: {1}]
  %10 = xla_tuple %s8, %s9
  %s11 = sld [smem:[#allocation0]]
  $region77: #{tpu_custom_call.1} parent=0
    _
  %s13 = ssub.s32 1, %s11
  %s14 = scalar_select 0, %s13, %s11
  $region1: #{tpu_custom_call.1} parent=0
    #allocation4 [shape = 'u8[49152]{0}', space=vmem, size = 0xc000, scoped, tag = 'input window, operand 0']
    #allocation5 [shape = 's32[2]{0}', space=sflag, size = 0x8, scoped, tag = 'scoped memory for tpu_custom_call.1']
    #allocation6 [shape = 's32[2]{0}', space=sflag, size = 0x8, scoped, tag = 'scoped memory for tpu_custom_call.1']
    #allocation7 [shape = 'u8[24576]{0}', space=vmem, size = 0x6000, scoped, tag = 'output window, operand 0']
    #allocation8 [shape = 'u8[24576]{0}', space=vmem, size = 0x6000, scoped, tag = 'output window, operand 1']
    #allocation9 [shape = 's32[2]{0}', space=sflag, size = 0x8, scoped, tag = 'scoped memory for tpu_custom_call.1']
    %15 = vsyncpa [#allocation5], 0
    %s16 = scalar_lea.sflag [#allocation5], 1
    %17 = vsyncpa %s16, 0
    %18 = vsyncpa [#allocation6], 0
    %s19 = scalar_lea.sflag [#allocation6], 1
    %20 = vsyncpa %s19, 0
    %21 = vsyncpa [#allocation9], 0
    %s22 = scalar_lea.sflag [#allocation9], 1
    %23 = vsyncpa %s22, 0
    loop: start=0, step=1, limit=4
    $region2: #{tpu_custom_call.1} parent=1 // loop_pre_header
      _
    $region3: #{tpu_custom_call.1} parent=1 // loop_header
      %s25 = sphi 0, %s29
      %p26 = scmp.ge.s32.totalorder %s25, 4
      %s35 = sphi 0, %s37
      %s38 = sphi 0, %s35
      %s39 = sphi 0, %s38
      %s55 = sphi 0, %s39
      %s59 = sphi 0, %s59
      %s61 = sphi 0, %s59
      %s62 = sphi 0, %s61
      %s76 = sphi 0, %s62
      %s80 = sphi 0, %s80
      %s82 = sphi 0, %s80
      %s83 = sphi 0, %s82
      %s97 = sphi 0, %s83
      %s101 = sphi 0, %s101
      %s103 = sphi 0, %s101
      %s104 = sphi 0, %s103
      %s118 = sphi 0, %s104
      %s122 = sphi 0, %s122
      %s124 = sphi 0, %s122
      %s125 = sphi 0, %s124
      %s139 = sphi 0, %s125
      %s143 = sphi 0, %s143
      %s145 = sphi 0, %s143
      %s146 = sphi 0, %s145
      %s160 = sphi 0, %s146
      %s164 = sphi 0, %s164
      %s166 = sphi 0, %s164
      %s167 = sphi 0, %s166
      %s181 = sphi 0, %s167
      %s185 = sphi 0, %s185
      %s187 = sphi 0, %s185
      %s188 = sphi 0, %s187
      %s202 = sphi 0, %s188
      %s208 = sphi 0, %s210
      %s211 = sphi 0, %s208
      %s212 = sphi 0, %s211
      %s228 = sphi 0, %s212
      %s234 = sphi 0, %s236
      %s237 = sphi 0, %s234
      %s238 = sphi 0, %s237
      %s254 = sphi 0, %s238
    $region4: #{tpu_custom_call.1} parent=1 // loop_header_branch
      %28 = sbr.rel (%p26) target = $region8
    $region5: #{tpu_custom_call.1} parent=1 // loop_body
      %s30 = ssub.s32 %s25, 1
      %s31 = ssub.s32 %s25, 2
      %s32 = sadd.s32 %s25, 1
      %s33 = ssub.s32 %s25, %s32
      %p34 = scmp.eq.s32.totalorder %s33, 0
      %s36 = sadd.s32 %s35, 1
      %s37 = scalar_select %p34, %s35, %s36
      %p40 = pneg %p34
      %p41 = scmp.eq.s32.totalorder %s25, 1
      %p42 = por %p40, %p41
      %p43 = scmp.ne.s32.totalorder %s35, %s38
      %p44 = scmp.eq.s32.totalorder %s25, 0
      %p45 = por %p43, %p44
      %p46 = scmp.ne.s32.totalorder %s35, %s38
      %p47 = scmp.eq.s32.totalorder %s30, 1
      %p48 = por %p46, %p47
      %p49 = scmp.ne.s32.totalorder %s38, %s39
      %p50 = scmp.eq.s32.totalorder %s30, 0
      %p51 = por %p49, %p50
      %p52 = scmp.ne.s32.totalorder %s38, %s39
      %p53 = scmp.eq.s32.totalorder %s31, 1
      %p54 = por %p52, %p53
      %p56 = scmp.ne.s32.totalorder %s39, %s55
      %p57 = scmp.eq.s32.totalorder %s31, 0
      %p58 = por %p56, %p57
      %s60 = sadd.s32 %s59, 1
      %p63 = scmp.eq.s32.totalorder %s25, 1
      %p64 = scmp.ne.s32.totalorder %s59, %s61
      %p65 = scmp.eq.s32.totalorder %s25, 0
      %p66 = por %p64, %p65
      %p67 = scmp.ne.s32.totalorder %s59, %s61
      %p68 = scmp.eq.s32.totalorder %s30, 1
      %p69 = por %p67, %p68
      %p70 = scmp.ne.s32.totalorder %s61, %s62
      %p71 = scmp.eq.s32.totalorder %s30, 0
      %p72 = por %p70, %p71
      %p73 = scmp.ne.s32.totalorder %s61, %s62
      %p74 = scmp.eq.s32.totalorder %s31, 1
      %p75 = por %p73, %p74
      %p77 = scmp.ne.s32.totalorder %s62, %s76
      %p78 = scmp.eq.s32.totalorder %s31, 0
      %p79 = por %p77, %p78
      %s81 = sadd.s32 %s80, 1
      %p84 = scmp.eq.s32.totalorder %s25, 1
      %p85 = scmp.ne.s32.totalorder %s80, %s82
      %p86 = scmp.eq.s32.totalorder %s25, 0
      %p87 = por %p85, %p86
      %p88 = scmp.ne.s32.totalorder %s80, %s82
      %p89 = scmp.eq.s32.totalorder %s30, 1
      %p90 = por %p88, %p89
      %p91 = scmp.ne.s32.totalorder %s82, %s83
      %p92 = scmp.eq.s32.totalorder %s30, 0
      %p93 = por %p91, %p92
      %p94 = scmp.ne.s32.totalorder %s82, %s83
      %p95 = scmp.eq.s32.totalorder %s31, 1
      %p96 = por %p94, %p95
      %p98 = scmp.ne.s32.totalorder %s83, %s97
      %p99 = scmp.eq.s32.totalorder %s31, 0
      %p100 = por %p98, %p99
      %s102 = sadd.s32 %s101, 1
      %p105 = scmp.eq.s32.totalorder %s25, 1
      %p106 = scmp.ne.s32.totalorder %s101, %s103
      %p107 = scmp.eq.s32.totalorder %s25, 0
      %p108 = por %p106, %p107
      %p109 = scmp.ne.s32.totalorder %s101, %s103
      %p110 = scmp.eq.s32.totalorder %s30, 1
      %p111 = por %p109, %p110
      %p112 = scmp.ne.s32.totalorder %s103, %s104
      %p113 = scmp.eq.s32.totalorder %s30, 0
      %p114 = por %p112, %p113
      %p115 = scmp.ne.s32.totalorder %s103, %s104
      %p116 = scmp.eq.s32.totalorder %s31, 1
      %p117 = por %p115, %p116
      %p119 = scmp.ne.s32.totalorder %s104, %s118
      %p120 = scmp.eq.s32.totalorder %s31, 0
      %p121 = por %p119, %p120
      %s123 = sadd.s32 %s122, 1
      %p126 = scmp.eq.s32.totalorder %s25, 1
      %p127 = scmp.ne.s32.totalorder %s122, %s124
      %p128 = scmp.eq.s32.totalorder %s25, 0
      %p129 = por %p127, %p128
      %p130 = scmp.ne.s32.totalorder %s122, %s124
      %p131 = scmp.eq.s32.totalorder %s30, 1
      %p132 = por %p130, %p131
      %p133 = scmp.ne.s32.totalorder %s124, %s125
      %p134 = scmp.eq.s32.totalorder %s30, 0
      %p135 = por %p133, %p134
      %p136 = scmp.ne.s32.totalorder %s124, %s125
      %p137 = scmp.eq.s32.totalorder %s31, 1
      %p138 = por %p136, %p137
      %p140 = scmp.ne.s32.totalorder %s125, %s139
      %p141 = scmp.eq.s32.totalorder %s31, 0
      %p142 = por %p140, %p141
      %s144 = sadd.s32 %s143, 1
      %p147 = scmp.eq.s32.totalorder %s25, 1
      %p148 = scmp.ne.s32.totalorder %s143, %s145
      %p149 = scmp.eq.s32.totalorder %s25, 0
      %p150 = por %p148, %p149
      %p151 = scmp.ne.s32.totalorder %s143, %s145
      %p152 = scmp.eq.s32.totalorder %s30, 1
      %p153 = por %p151, %p152
      %p154 = scmp.ne.s32.totalorder %s145, %s146
      %p155 = scmp.eq.s32.totalorder %s30, 0
      %p156 = por %p154, %p155
      %p157 = scmp.ne.s32.totalorder %s145, %s146
      %p158 = scmp.eq.s32.totalorder %s31, 1
      %p159 = por %p157, %p158
      %p161 = scmp.ne.s32.totalorder %s146, %s160
      %p162 = scmp.eq.s32.totalorder %s31, 0
      %p163 = por %p161, %p162
      %s165 = sadd.s32 %s164, 1
      %p168 = scmp.eq.s32.totalorder %s25, 1
      %p169 = scmp.ne.s32.totalorder %s164, %s166
      %p170 = scmp.eq.s32.totalorder %s25, 0
      %p171 = por %p169, %p170
      %p172 = scmp.ne.s32.totalorder %s164, %s166
      %p173 = scmp.eq.s32.totalorder %s30, 1
      %p174 = por %p172, %p173
      %p175 = scmp.ne.s32.totalorder %s166, %s167
      %p176 = scmp.eq.s32.totalorder %s30, 0
      %p177 = por %p175, %p176
      %p178 = scmp.ne.s32.totalorder %s166, %s167
      %p179 = scmp.eq.s32.totalorder %s31, 1
      %p180 = por %p178, %p179
      %p182 = scmp.ne.s32.totalorder %s167, %s181
      %p183 = scmp.eq.s32.totalorder %s31, 0
      %p184 = por %p182, %p183
      %s186 = sadd.s32 %s185, 1
      %p189 = scmp.eq.s32.totalorder %s25, 1
      %p190 = scmp.ne.s32.totalorder %s185, %s187
      %p191 = scmp.eq.s32.totalorder %s25, 0
      %p192 = por %p190, %p191
      %p193 = scmp.ne.s32.totalorder %s185, %s187
      %p194 = scmp.eq.s32.totalorder %s30, 1
      %p195 = por %p193, %p194
      %p196 = scmp.ne.s32.totalorder %s187, %s188
      %p197 = scmp.eq.s32.totalorder %s30, 0
      %p198 = por %p196, %p197
      %p199 = scmp.ne.s32.totalorder %s187, %s188
      %p200 = scmp.eq.s32.totalorder %s31, 1
      %p201 = por %p199, %p200
      %p203 = scmp.ne.s32.totalorder %s188, %s202
      %p204 = scmp.eq.s32.totalorder %s31, 0
      %p205 = por %p203, %p204
      %s206 = ssub.s32 %s25, %s32
      %p207 = scmp.eq.s32.totalorder %s206, 0
      %s209 = sadd.s32 %s208, 1
      %s210 = scalar_select %p207, %s208, %s209
      %p213 = pneg %p207
      %p214 = scmp.eq.s32.totalorder %s25, 1
      %p215 = por %p213, %p214
      %p216 = scmp.ne.s32.totalorder %s208, %s211
      %p217 = scmp.eq.s32.totalorder %s25, 0
      %p218 = por %p216, %p217
      %p219 = scmp.ne.s32.totalorder %s208, %s211
      %p220 = scmp.eq.s32.totalorder %s30, 1
      %p221 = por %p219, %p220
      %p222 = scmp.ne.s32.totalorder %s211, %s212
      %p223 = scmp.eq.s32.totalorder %s30, 0
      %p224 = por %p222, %p223
      %p225 = scmp.ne.s32.totalorder %s211, %s212
      %p226 = scmp.eq.s32.totalorder %s31, 1
      %p227 = por %p225, %p226
      %p229 = scmp.ne.s32.totalorder %s212, %s228
      %p230 = scmp.eq.s32.totalorder %s31, 0
      %p231 = por %p229, %p230
      %s232 = ssub.s32 %s25, %s32
      %p233 = scmp.eq.s32.totalorder %s232, 0
      %s235 = sadd.s32 %s234, 1
      %s236 = scalar_select %p233, %s234, %s235
      %p239 = pneg %p233
      %p240 = scmp.eq.s32.totalorder %s25, 1
      %p241 = por %p239, %p240
      %p242 = scmp.ne.s32.totalorder %s234, %s237
      %p243 = scmp.eq.s32.totalorder %s25, 0
      %p244 = por %p242, %p243
      %p245 = scmp.ne.s32.totalorder %s234, %s237
      %p246 = scmp.eq.s32.totalorder %s30, 1
      %p247 = por %p245, %p246
      %p248 = scmp.ne.s32.totalorder %s237, %s238
      %p249 = scmp.eq.s32.totalorder %s30, 0
      %p250 = por %p248, %p249
      %p251 = scmp.ne.s32.totalorder %s237, %s238
      %p252 = scmp.eq.s32.totalorder %s31, 1
      %p253 = por %p251, %p252
      %p255 = scmp.ne.s32.totalorder %s238, %s254
      %p256 = scmp.eq.s32.totalorder %s31, 0
      %p257 = por %p255, %p256
      %p258 = scmp.le.s32.totalorder 1, %s25
      %p259 = scmp.lt.s32.totalorder %s25, 3
      %p260 = pnand %p258, %p259
      %p261 = pneg %p260
      // Predicated region
      $region9: #{tpu_custom_call.1} parent=5 // pred_check
        _
      $region10: #{tpu_custom_call.1} parent=5 // pred_check_branch
        %263 = sbr.rel (%p260) target = $region12
      $region11: #{tpu_custom_call.1} parent=5 // pred_region
        %s264 = ssub.s32 %s25, 1
        // Predicated region
        $region13: #{tpu_custom_call.1} parent=11 // pred_check
          %p265 = pneg %p72
        $region14: #{tpu_custom_call.1} parent=11 // pred_check_branch
          %267 = sbr.rel (%p265) target = $region16
        $region15: #{tpu_custom_call.1} parent=11 // pred_region
          _
        $region16: #{tpu_custom_call.1} parent=11 // pred_fallthru
          _
        // Predicated region
        $region17: #{tpu_custom_call.1} parent=11 // pred_check
          %p268 = pneg %p93
        $region18: #{tpu_custom_call.1} parent=11 // pred_check_branch
          %270 = sbr.rel (%p268) target = $region20
        $region19: #{tpu_custom_call.1} parent=11 // pred_region
          _
        $region20: #{tpu_custom_call.1} parent=11 // pred_fallthru
          _
        // Predicated region
        $region21: #{tpu_custom_call.1} parent=11 // pred_check
          %p271 = pneg %p114
        $region22: #{tpu_custom_call.1} parent=11 // pred_check_branch
          %273 = sbr.rel (%p271) target = $region24
        $region23: #{tpu_custom_call.1} parent=11 // pred_region
          _
        $region24: #{tpu_custom_call.1} parent=11 // pred_fallthru
          _
        // Predicated region
        $region25: #{tpu_custom_call.1} parent=11 // pred_check
          %p274 = pneg %p135
        $region26: #{tpu_custom_call.1} parent=11 // pred_check_branch
          %276 = sbr.rel (%p274) target = $region28
        $region27: #{tpu_custom_call.1} parent=11 // pred_region
          _
        $region28: #{tpu_custom_call.1} parent=11 // pred_fallthru
          _
        // Predicated region
        $region29: #{tpu_custom_call.1} parent=11 // pred_check
          %p277 = pneg %p156
        $region30: #{tpu_custom_call.1} parent=11 // pred_check_branch
          %279 = sbr.rel (%p277) target = $region32
        $region31: #{tpu_custom_call.1} parent=11 // pred_region
          _
        $region32: #{tpu_custom_call.1} parent=11 // pred_fallthru
          _
        // Predicated region
        $region33: #{tpu_custom_call.1} parent=11 // pred_check
          %p280 = pneg %p177
        $region34: #{tpu_custom_call.1} parent=11 // pred_check_branch
          %282 = sbr.rel (%p280) target = $region36
        $region35: #{tpu_custom_call.1} parent=11 // pred_region
          _
        $region36: #{tpu_custom_call.1} parent=11 // pred_fallthru
          _
        // Predicated region
        $region37: #{tpu_custom_call.1} parent=11 // pred_check
          %p283 = pneg %p198
        $region38: #{tpu_custom_call.1} parent=11 // pred_check_branch
          %285 = sbr.rel (%p283) target = $region40
        $region39: #{tpu_custom_call.1} parent=11 // pred_region
          _
        $region40: #{tpu_custom_call.1} parent=11 // pred_fallthru
          _
      $region12: #{tpu_custom_call.1} parent=5 // pred_fallthru
        _
      %p286 = scmp.lt.s32.totalorder %s25, 2
      // Predicated region
      $region41: #{tpu_custom_call.1} parent=5 // pred_check
        %p287 = pneg %p286
      $region42: #{tpu_custom_call.1} parent=5 // pred_check_branch
        %289 = sbr.rel (%p287) target = $region44
      $region43: #{tpu_custom_call.1} parent=5 // pred_region
        // Predicated region
        $region45: #{tpu_custom_call.1} parent=43 // pred_check
          %p290 = pneg %p45
        $region46: #{tpu_custom_call.1} parent=43 // pred_check_branch
          %292 = sbr.rel (%p290) target = $region48
        $region47: #{tpu_custom_call.1} parent=43 // pred_region
          %s293 = sand.u32 %s35, 1
          %s294 = scalar_lea.sflag [#allocation5], %s293
          %s295 = sand.u32 %s35, 1
          %s296 = smul.addr %s295, 48
          %s297 = scalar_lea.vmem [#allocation4], %s296
          %299 = vsyncadd %s294, 0
          %s300 = smul.addr %s25, 12
          %s301 = smul.addr %s300, 4
          %s302 = scalar_lea.hbm %s0, %s301
          %s303 = sshll.u32 %s302, 4
          %s304 = int_to_ptr.hbm [resolvable:$true] %s303
          %s305 = sshll.u32 %s297, 4
          %s306 = int_to_ptr.vmem [resolvable:$true] %s305
          %311 = dma.hbm_to_vmem [thread:$0]  %s304, 768, %s306, %s294, 192, 192, 12
        $region48: #{tpu_custom_call.1} parent=43 // pred_fallthru
          _
      $region44: #{tpu_custom_call.1} parent=5 // pred_fallthru
        _
      %p312 = scmp.le.s32.totalorder 1, %s25
      %p313 = scmp.lt.s32.totalorder %s25, 3
      %p314 = pnand %p312, %p313
      %p315 = pneg %p314
      // Predicated region
      $region49: #{tpu_custom_call.1} parent=5 // pred_check
        _
      $region50: #{tpu_custom_call.1} parent=5 // pred_check_branch
        %317 = sbr.rel (%p314) target = $region52
      $region51: #{tpu_custom_call.1} parent=5 // pred_region
        %s318 = ssub.s32 %s25, 1
        %s319 = sand.u32 %s38, 1
        %s320 = scalar_lea.sflag [#allocation5], %s319
        %s321 = sand.u32 %s38, 1
        %s322 = smul.addr %s321, 48
        %s323 = scalar_lea.vmem [#allocation4], %s322
        // Predicated region
        $region53: #{tpu_custom_call.1} parent=51 // pred_check
          %p324 = pneg %p51
        $region54: #{tpu_custom_call.1} parent=51 // pred_check_branch
          %326 = sbr.rel (%p324) target = $region56
        $region55: #{tpu_custom_call.1} parent=51 // pred_region
          %328 = dma.done %s320, 768
        $region56: #{tpu_custom_call.1} parent=51 // pred_fallthru
          _
        %s329 = sand.u32 %s38, 1
        %s330 = scalar_lea.sflag [#allocation5], %s329
        %s331 = sand.u32 %s38, 1
        %s332 = smul.addr %s331, 48
        %s333 = scalar_lea.vmem [#allocation4], %s332
        %p334 = pneg %p51
        %p335 = pneg %p48
        %p336 = pneg %p72
        %p337 = pneg %p69
        %p338 = pneg %p93
        %p339 = pneg %p90
        %p340 = pneg %p114
        %p341 = pneg %p111
        %p342 = pneg %p135
        %p343 = pneg %p132
        %p344 = pneg %p156
        %p345 = pneg %p153
        %p346 = pneg %p177
        %p347 = pneg %p174
        %p348 = pneg %p198
        %p349 = pneg %p195
        %p350 = pneg %p224
        %p351 = pneg %p221
        %s352 = sand.u32 %s211, 1
        %s353 = scalar_lea.sflag [#allocation6], %s352
        %s354 = sand.u32 %s211, 1
        %s355 = smul.addr %s354, 24
        %s356 = scalar_lea.vmem [#allocation7], %s355
        %p357 = pneg %p250
        %p358 = pneg %p247
        %s359 = sand.u32 %s237, 1
        %s360 = scalar_lea.sflag [#allocation9], %s359
        %s361 = sand.u32 %s237, 1
        %s362 = smul.addr %s361, 24
        %s363 = scalar_lea.vmem [#allocation8], %s362
        %v365 = vld [vmem:[%s1] sm:$0x7]
        %v366 = vld [vmem:[%s323] sm:$0xff]
        %v367 = vld [vmem:[%s323 + $0x8] sm:$0xf]
        %v368 = vld [vmem:[%s323 + $0xc] sm:$0xff]
        %v369 = vld [vmem:[%s323 + $0x14] sm:$0xf]
        %v370 = vld [vmem:[%s323 + $0x18] sm:$0xff]
        %v371 = vld [vmem:[%s323 + $0x20] sm:$0xf]
        %v372 = vld [vmem:[%s323 + $0x24] sm:$0xff]
        %v373 = vld [vmem:[%s323 + $0x2c] sm:$0xf]
        %v374 = vld [vmem:[%s2] sm:$0xf]
        %v375 = vld [vmem:[%s2 + $0x4] sm:$0xf]
        %v376 = vld [vmem:[%s3] sm:$0xff]
        %v377 = vld [vmem:[%s3 + $0x8] sm:$0xff]
        %379 = vset.pattern.permute.xlu0 0
        %380 = vperm.xlu0 %379, %v376
        %v381 = vpop.permute.xlu0 %380
        %384 = vset.pattern.permute.xlu0 0
        %385 = vperm.xlu0 %384, %v377
        %v386 = vpop.permute.xlu0 %385
        %v390 = vunpack.c.l.b16 %v374
        %v391 = vunpack.c.l.b16 %v375
        %v392 = vpack.c.b16 %v391, %v390
        %v401 = vunpack.c.l.b16 %v366
        %v402 = vunpack.c.h.b16 %v366
        %v403 = vunpack.c.l.b16 %v367
        %v404 = vunpack.c.l.b16 %v368
        %v405 = vunpack.c.h.b16 %v368
        %v406 = vunpack.c.l.b16 %v369
        %v407 = vunpack.c.l.b16 %v370
        %v408 = vunpack.c.h.b16 %v370
        %v409 = vunpack.c.l.b16 %v371
        %v410 = vunpack.c.l.b16 %v372
        %v411 = vunpack.c.h.b16 %v372
        %v412 = vunpack.c.l.b16 %v373
        %v413 = vpack.c.b16 %v404, %v401
        %v414 = vpack.c.b16 %v405, %v402
        %v415 = vpack.c.b16 %v406, %v403
        %v416 = vpack.c.b16 %v410, %v407
        %v417 = vpack.c.b16 %v411, %v408
        %v418 = vpack.c.b16 %v412, %v409
        %vm425 = vcmask 261120
        %v427 = vsel %vm425, %v392, 0
        %429 = vmatpush.bf16.msra.mxu0 0
        %430 = vmatpush.bf16.msra.mxu0 0
        %431 = vmatpush.bf16.msra.mxu0 0
        %432 = vmatpush.bf16.msra.mxu0 0
        %433 = vmatpush.bf16.msra.mxu0 0
        %434 = vmatpush.bf16.msra.mxu0 0
        %435 = vmatpush.bf16.msra.mxu0 %v416
        %436 = vmatpush.bf16.msra.mxu0 %v413
        %437 = vmatmul.bf16.gmra.mxu0 %v427
        %v438 = vpop.f32.mrf.mxu0
        %v439 = vadd.f32 %v381, %v438
        %v440 = vpop.f32.mrf.mxu0
        %v441 = vadd.f32 %v386, %v440
        %442 = vdwg.mxu0
        %443 = vmatpush.bf16.msra.mxu0 0
        %444 = vmatpush.bf16.msra.mxu0 0
        %445 = vmatpush.bf16.msra.mxu0 0
        %446 = vmatpush.bf16.msra.mxu0 0
        %447 = vmatpush.bf16.msra.mxu0 0
        %448 = vmatpush.bf16.msra.mxu0 0
        %449 = vmatpush.bf16.msra.mxu0 %v417
        %450 = vmatpush.bf16.msra.mxu0 %v414
        %451 = vmatmul.bf16.gmra.mxu0 %v427
        %v452 = vpop.f32.mrf.mxu0
        %v453 = vadd.f32 %v381, %v452
        %v454 = vpop.f32.mrf.mxu0
        %v455 = vadd.f32 %v386, %v454
        %456 = vdwg.mxu0
        %457 = vmatpush.bf16.msra.mxu0 0
        %458 = vmatpush.bf16.msra.mxu0 0
        %459 = vmatpush.bf16.msra.mxu0 0
        %460 = vmatpush.bf16.msra.mxu0 0
        %461 = vmatpush.bf16.msra.mxu0 0
        %462 = vmatpush.bf16.msra.mxu0 0
        %463 = vmatpush.bf16.msra.mxu0 %v418
        %464 = vmatpush.bf16.msra.mxu0 %v415
        %465 = vmatmul.bf16.gmra.mxu0 %v427
        %v466 = vpop.f32.mrf.mxu0
        %v467 = vadd.f32 %v381, %v466
        %v468 = vpop.f32.mrf.mxu0
        %v469 = vadd.f32 %v386, %v468
        %470 = vdwg.mxu0
        %v471 = vsub.f32 0.0, %v439
        %v472 = vsub.f32 0.0, %v453
        %v473 = vsub.f32 0.0, %v467
        %v474 = vsub.f32 0.0, %v441
        %v475 = vsub.f32 0.0, %v455
        %v476 = vsub.f32 0.0, %v469
        %v477 = vmul.f32 %v471, 1.442695
        %v478 = vpow.pop %v477
        %v479 = vmul.f32 %v472, 1.442695
        %v480 = vpow.pop %v479
        %v481 = vmul.f32 %v473, 1.442695
        %v482 = vpow.pop %v481
        %v483 = vmul.f32 %v474, 1.442695
        %v484 = vpow.pop %v483
        %v485 = vmul.f32 %v475, 1.442695
        %v486 = vpow.pop %v485
        %v487 = vmul.f32 %v476, 1.442695
        %v488 = vpow.pop %v487
        %v489 = vadd.f32 %v478, 1.0
        %v490 = vadd.f32 %v480, 1.0
        %v491 = vadd.f32 %v482, 1.0
        %v492 = vadd.f32 %v484, 1.0
        %v493 = vadd.f32 %v486, 1.0
        %v494 = vadd.f32 %v488, 1.0
        %v495 = vrcp.pop %v489
        %v496 = vrcp.pop %v490
        %v497 = vrcp.pop %v491
        %v498 = vrcp.pop %v492
        %v499 = vrcp.pop %v493
        %v500 = vrcp.pop %v494
        %v501 = vmul.f32 %v439, %v495
        %v502 = vmul.f32 %v453, %v496
        %v503 = vmul.f32 %v467, %v497
        %v504 = vmul.f32 %v441, %v498
        %v505 = vmul.f32 %v455, %v499
        %v506 = vmul.f32 %v469, %v500
        %vm507 = vcmp.gt.f32.partialorder %v365, 0.5
        %v508 = vsel %vm507, 1, 0
        %v509 = vperm.slane %v508, 0
        %v510 = vperm.slane %v508, 1
        %v511 = vperm.slane %v508, 2
        %vm512 = vcmp.eq.s32.totalorder %v509, 1
        %vm513 = vcmp.eq.s32.totalorder %v510, 1
        %vm514 = vcmp.eq.s32.totalorder %v511, 1
        %v515 = vsel %vm512, %v501, -1e+30
        %v516 = vsel %vm513, %v502, -1e+30
        %v517 = vsel %vm514, %v503, -1e+30
        %v518 = vsel %vm512, %v504, -1e+30
        %v519 = vsel %vm513, %v505, -1e+30
        %v520 = vsel %vm514, %v506, -1e+30
        %521 = vst [vmem:[#allocation3 + $0x8] sm:$0xff] %v515
        %522 = vst [vmem:[#allocation3 + $0x10] sm:$0xff] %v516
        %vm523 = vcmask 556032
        %524 = vst.msk [vmem:[#allocation3 + $0x18] sm:$0xff] %vm523, %v517
        %525 = vst [vmem:[#allocation3 + $0x30] sm:$0xff] %v518
        %526 = vst [vmem:[#allocation3 + $0x38] sm:$0xff] %v519
        %527 = vst.msk [vmem:[#allocation3 + $0x40] sm:$0xff] %vm523, %v520
        %v528 = vld [vmem:[#allocation3] sm:$0xff]
        %v529 = vld [vmem:[#allocation3 + $0x8] sm:$0xff]
        %v530 = vld [vmem:[#allocation3 + $0x10] sm:$0xff]
        %v531 = vld [vmem:[#allocation3 + $0x18] sm:$0xff]
        %v532 = vld [vmem:[#allocation3 + $0x28] sm:$0xff]
        %v533 = vld [vmem:[#allocation3 + $0x30] sm:$0xff]
        %v534 = vld [vmem:[#allocation3 + $0x38] sm:$0xff]
        %v535 = vld [vmem:[#allocation3 + $0x40] sm:$0xff]
        %544 = vrot.lane.b32.xlu0 %v528, 127
        %v545 = vpop.permute.xlu0 %544
        %546 = vrot.lane.b32.xlu0 %v529, 127
        %v547 = vpop.permute.xlu0 %546
        %548 = vrot.lane.b32.xlu0 %v530, 127
        %v549 = vpop.permute.xlu0 %548
        %550 = vrot.lane.b32.xlu0 %v531, 127
        %v551 = vpop.permute.xlu0 %550
        %552 = vrot.lane.b32.xlu0 %v532, 127
        %v553 = vpop.permute.xlu0 %552
        %554 = vrot.lane.b32.xlu0 %v533, 127
        %v555 = vpop.permute.xlu0 %554
        %556 = vrot.lane.b32.xlu0 %v534, 127
        %v557 = vpop.permute.xlu0 %556
        %558 = vrot.lane.b32.xlu0 %v535, 127
        %v559 = vpop.permute.xlu0 %558
        %vm560 = vcmask 1039360
        %v561 = vsel %vm560, %v545, %v547
        %v562 = vsel %vm560, %v547, %v549
        %v563 = vsel %vm560, %v549, %v551
        %v564 = vsel %vm560, %v553, %v555
        %v565 = vsel %vm560, %v555, %v557
        %v566 = vsel %vm560, %v557, %v559
        %v575 = vmax.f32 %v528, %v561
        %v576 = vmax.f32 %v529, %v562
        %v577 = vmax.f32 %v530, %v563
        %v578 = vmax.f32 %v531, %v551
        %v579 = vmax.f32 %v532, %v564
        %v580 = vmax.f32 %v533, %v565
        %v581 = vmax.f32 %v534, %v566
        %v582 = vmax.f32 %v535, %v559
        %583 = vrot.lane.b32.xlu0 %v528, 126
        %v584 = vpop.permute.xlu0 %583
        %585 = vrot.lane.b32.xlu0 %v529, 126
        %v586 = vpop.permute.xlu0 %585
        %587 = vrot.lane.b32.xlu0 %v530, 126
        %v588 = vpop.permute.xlu0 %587
        %589 = vrot.lane.b32.xlu0 %v531, 126
        %v590 = vpop.permute.xlu0 %589
        %591 = vrot.lane.b32.xlu0 %v532, 126
        %v592 = vpop.permute.xlu0 %591
        %593 = vrot.lane.b32.xlu0 %v533, 126
        %v594 = vpop.permute.xlu0 %593
        %595 = vrot.lane.b32.xlu0 %v534, 126
        %v596 = vpop.permute.xlu0 %595
        %597 = vrot.lane.b32.xlu0 %v535, 126
        %v598 = vpop.permute.xlu0 %597
        %vm599 = vcmask 1031168
        %v600 = vsel %vm599, %v584, %v586
        %v601 = vsel %vm599, %v586, %v588
        %v602 = vsel %vm599, %v588, %v590
        %v603 = vsel %vm599, %v592, %v594
        %v604 = vsel %vm599, %v594, %v596
        %v605 = vsel %vm599, %v596, %v598
        %v614 = vmax.f32 %v575, %v600
        %v615 = vmax.f32 %v576, %v601
        %v616 = vmax.f32 %v577, %v602
        %v617 = vmax.f32 %v578, %v590
        %v618 = vmax.f32 %v579, %v603
        %v619 = vmax.f32 %v580, %v604
        %v620 = vmax.f32 %v581, %v605
        %v621 = vmax.f32 %v582, %v598
        %622 = vrot.lane.b32.xlu0 %v528, 110
        %v623 = vpop.permute.xlu0 %622
        %624 = vrot.lane.b32.xlu0 %v529, 110
        %v625 = vpop.permute.xlu0 %624
        %626 = vrot.lane.b32.xlu0 %v530, 110
        %v627 = vpop.permute.xlu0 %626
        %628 = vrot.lane.b32.xlu0 %v531, 110
        %v629 = vpop.permute.xlu0 %628
        %630 = vrot.lane.b32.xlu0 %v532, 110
        %v631 = vpop.permute.xlu0 %630
        %632 = vrot.lane.b32.xlu0 %v533, 110
        %v633 = vpop.permute.xlu0 %632
        %634 = vrot.lane.b32.xlu0 %v534, 110
        %v635 = vpop.permute.xlu0 %634
        %636 = vrot.lane.b32.xlu0 %v535, 110
        %v637 = vpop.permute.xlu0 %636
        %vm638 = vcmask 900096
        %v639 = vsel %vm638, %v623, %v625
        %v640 = vsel %vm638, %v625, %v627
        %v641 = vsel %vm638, %v627, %v629
        %v642 = vsel %vm638, %v631, %v633
        %v643 = vsel %vm638, %v633, %v635
        %v644 = vsel %vm638, %v635, %v637
        %v653 = vmax.f32 %v614, %v639
        %v654 = vmax.f32 %v615, %v640
        %v655 = vmax.f32 %v616, %v641
        %v656 = vmax.f32 %v617, %v629
        %v657 = vmax.f32 %v618, %v642
        %v658 = vmax.f32 %v619, %v643
        %v659 = vmax.f32 %v620, %v644
        %v660 = vmax.f32 %v621, %v637
        %661 = vrot.lane.b32.xlu0 %v529, 109
        %v662 = vpop.permute.xlu0 %661
        %663 = vrot.lane.b32.xlu0 %v530, 109
        %v664 = vpop.permute.xlu0 %663
        %665 = vrot.lane.b32.xlu0 %v531, 109
        %v666 = vpop.permute.xlu0 %665
        %667 = vrot.lane.b32.xlu0 %v533, 109
        %v668 = vpop.permute.xlu0 %667
        %669 = vrot.lane.b32.xlu0 %v534, 109
        %v670 = vpop.permute.xlu0 %669
        %671 = vrot.lane.b32.xlu0 %v535, 109
        %v672 = vpop.permute.xlu0 %671
        %vm673 = vcmask 891904
        %v674 = vsel %vm673, %v662, %v664
        %v675 = vsel %vm673, %v664, %v666
        %v676 = vsel %vm673, %v668, %v670
        %v677 = vsel %vm673, %v670, %v672
        %v686 = vmax.f32 %v653, %v662
        %v687 = vmax.f32 %v654, %v674
        %v688 = vmax.f32 %v655, %v675
        %v689 = vmax.f32 %v656, %v666
        %v690 = vmax.f32 %v657, %v668
        %v691 = vmax.f32 %v658, %v676
        %v692 = vmax.f32 %v659, %v677
        %v693 = vmax.f32 %v660, %v672
        %694 = vrot.lane.b32.xlu0 %v529, 108
        %v695 = vpop.permute.xlu0 %694
        %696 = vrot.lane.b32.xlu0 %v530, 108
        %v697 = vpop.permute.xlu0 %696
        %698 = vrot.lane.b32.xlu0 %v531, 108
        %v699 = vpop.permute.xlu0 %698
        %700 = vrot.lane.b32.xlu0 %v533, 108
        %v701 = vpop.permute.xlu0 %700
        %702 = vrot.lane.b32.xlu0 %v534, 108
        %v703 = vpop.permute.xlu0 %702
        %704 = vrot.lane.b32.xlu0 %v535, 108
        %v705 = vpop.permute.xlu0 %704
        %vm706 = vcmask 883712
        %v707 = vsel %vm706, %v695, %v697
        %v708 = vsel %vm706, %v697, %v699
        %v709 = vsel %vm706, %v701, %v703
        %v710 = vsel %vm706, %v703, %v705
        %v719 = vmax.f32 %v686, %v695
        %v720 = vmax.f32 %v687, %v707
        %v721 = vmax.f32 %v688, %v708
        %v722 = vmax.f32 %v689, %v699
        %v723 = vmax.f32 %v690, %v701
        %v724 = vmax.f32 %v691, %v709
        %v725 = vmax.f32 %v692, %v710
        %v726 = vmax.f32 %v693, %v705
        %727 = vrot.lane.b32.xlu0 %v529, 92
        %v728 = vpop.permute.xlu0 %727
        %729 = vrot.lane.b32.xlu0 %v530, 92
        %v730 = vpop.permute.xlu0 %729
        %731 = vrot.lane.b32.xlu0 %v531, 92
        %v732 = vpop.permute.xlu0 %731
        %733 = vrot.lane.b32.xlu0 %v533, 92
        %v734 = vpop.permute.xlu0 %733
        %735 = vrot.lane.b32.xlu0 %v534, 92
        %v736 = vpop.permute.xlu0 %735
        %737 = vrot.lane.b32.xlu0 %v535, 92
        %v738 = vpop.permute.xlu0 %737
        %vm739 = vcmask 752640
        %v740 = vsel %vm739, %v728, %v730
        %v741 = vsel %vm739, %v730, %v732
        %v742 = vsel %vm739, %v734, %v736
        %v743 = vsel %vm739, %v736, %v738
        %v752 = vmax.f32 %v719, %v728
        %v753 = vmax.f32 %v720, %v740
        %v754 = vmax.f32 %v721, %v741
        %v755 = vmax.f32 %v722, %v732
        %v756 = vmax.f32 %v723, %v734
        %v757 = vmax.f32 %v724, %v742
        %v758 = vmax.f32 %v725, %v743
        %v759 = vmax.f32 %v726, %v738
        %760 = vrot.lane.b32.xlu0 %v529, 91
        %v761 = vpop.permute.xlu0 %760
        %762 = vrot.lane.b32.xlu0 %v530, 91
        %v763 = vpop.permute.xlu0 %762
        %764 = vrot.lane.b32.xlu0 %v531, 91
        %v765 = vpop.permute.xlu0 %764
        %766 = vrot.lane.b32.xlu0 %v533, 91
        %v767 = vpop.permute.xlu0 %766
        %768 = vrot.lane.b32.xlu0 %v534, 91
        %v769 = vpop.permute.xlu0 %768
        %770 = vrot.lane.b32.xlu0 %v535, 91
        %v771 = vpop.permute.xlu0 %770
        %vm772 = vcmask 744448
        %v773 = vsel %vm772, %v761, %v763
        %v774 = vsel %vm772, %v763, %v765
        %v775 = vsel %vm772, %v767, %v769
        %v776 = vsel %vm772, %v769, %v771
        %v785 = vmax.f32 %v752, %v761
        %v786 = vmax.f32 %v753, %v773
        %v787 = vmax.f32 %v754, %v774
        %v788 = vmax.f32 %v755, %v765
        %v789 = vmax.f32 %v756, %v767
        %v790 = vmax.f32 %v757, %v775
        %v791 = vmax.f32 %v758, %v776
        %v792 = vmax.f32 %v759, %v771
        %793 = vrot.lane.b32.xlu0 %v529, 90
        %v794 = vpop.permute.xlu0 %793
        %795 = vrot.lane.b32.xlu0 %v530, 90
        %v796 = vpop.permute.xlu0 %795
        %797 = vrot.lane.b32.xlu0 %v531, 90
        %v798 = vpop.permute.xlu0 %797
        %799 = vrot.lane.b32.xlu0 %v533, 90
        %v800 = vpop.permute.xlu0 %799
        %801 = vrot.lane.b32.xlu0 %v534, 90
        %v802 = vpop.permute.xlu0 %801
        %803 = vrot.lane.b32.xlu0 %v535, 90
        %v804 = vpop.permute.xlu0 %803
        %vm805 = vcmask 736256
        %v806 = vsel %vm805, %v794, %v796
        %v807 = vsel %vm805, %v796, %v798
        %v808 = vsel %vm805, %v800, %v802
        %v809 = vsel %vm805, %v802, %v804
        %v818 = vmax.f32 %v785, %v794
        %v819 = vmax.f32 %v786, %v806
        %v820 = vmax.f32 %v787, %v807
        %v821 = vmax.f32 %v788, %v798
        %v822 = vmax.f32 %v789, %v800
        %v823 = vmax.f32 %v790, %v808
        %v824 = vmax.f32 %v791, %v809
        %v825 = vmax.f32 %v792, %v804
        %v826 = vpack.c.bf16 %v819, %v818
        %v827 = vpack.c.bf16 %v821, %v820
        %v828 = vpack.c.bf16 %v823, %v822
        %v829 = vpack.c.bf16 %v825, %v824
        %834 = vrot.lane.b32.xlu0 %v826, 19
        %v835 = vpop.permute.xlu0 %834
        %836 = vrot.lane.b32.xlu0 %v827, 19
        %v837 = vpop.permute.xlu0 %836
        %838 = vrot.lane.b32.xlu0 %v828, 19
        %v839 = vpop.permute.xlu0 %838
        %840 = vrot.lane.b32.xlu0 %v829, 19
        %v841 = vpop.permute.xlu0 %840
        %v842 = vrot.slane %v835, 4
        %v843 = vrot.slane %v837, 4
        %v844 = vrot.slane %v839, 4
        %v845 = vrot.slane %v841, 4
        %vm846 = vcmask 1043456
        %v847 = vsel %vm846, %v842, %v843
        %vm848 = vcmask 154624
        %v849 = vsel %vm848, %v835, %v847
        %v850 = vsel %vm848, %v837, %v843
        %v851 = vsel %vm846, %v844, %v845
        %v852 = vsel %vm848, %v839, %v851
        %v853 = vsel %vm848, %v841, %v845
        %858 = vst [vmem:[%s363] sm:$0xff] %v849
        %vm859 = vcmask 551936
        %860 = vst.msk [vmem:[%s363 + $0x8] sm:$0xf] %vm859, %v850
        %861 = vst [vmem:[%s363 + $0xc] sm:$0xff] %v852
        %862 = vst.msk [vmem:[%s363 + $0x14] sm:$0xf] %vm859, %v853
        %v863 = vld [vmem:[%s4] sm:$0x3]
        %v864 = vpack.c.bf16 %v504, %v501
        %v865 = vpack.c.bf16 %v505, %v502
        %v866 = vpack.c.bf16 %v506, %v503
        %v867 = vld [vmem:[%s5] sm:$0xf]
        %869 = vset.pattern.permute.xlu0 0
        %870 = vperm.xlu0 %869, %v867
        %v871 = vpop.permute.xlu0 %870
        %vm873 = vcmask 130048
        %v875 = vsel %vm873, %v863, 0
        %877 = vmatpush.bf16.msra.mxu0 0
        %878 = vmatpush.bf16.msra.mxu0 0
        %879 = vmatpush.bf16.msra.mxu0 0
        %880 = vmatpush.bf16.msra.mxu0 0
        %881 = vmatpush.bf16.msra.mxu0 0
        %882 = vmatpush.bf16.msra.mxu0 0
        %883 = vmatpush.bf16.msra.mxu0 0
        %884 = vmatpush.bf16.msra.mxu0 %v864
        %885 = vmatmul.bf16.gmra.mxu0 %v875
        %v886 = vpop.f32.mrf.mxu0
        %v887 = vadd.f32 %v871, %v886
        %v888 = vpop.f32.mrf.mxu0
        %889 = vdwg.mxu0
        %890 = vmatpush.bf16.msra.mxu0 0
        %891 = vmatpush.bf16.msra.mxu0 0
        %892 = vmatpush.bf16.msra.mxu0 0
        %893 = vmatpush.bf16.msra.mxu0 0
        %894 = vmatpush.bf16.msra.mxu0 0
        %895 = vmatpush.bf16.msra.mxu0 0
        %896 = vmatpush.bf16.msra.mxu0 0
        %897 = vmatpush.bf16.msra.mxu0 %v865
        %898 = vmatmul.bf16.gmra.mxu0 %v875
        %v899 = vpop.f32.mrf.mxu0
        %v900 = vadd.f32 %v871, %v899
        %v901 = vpop.f32.mrf.mxu0
        %902 = vdwg.mxu0
        %903 = vmatpush.bf16.msra.mxu0 0
        %904 = vmatpush.bf16.msra.mxu0 0
        %905 = vmatpush.bf16.msra.mxu0 0
        %906 = vmatpush.bf16.msra.mxu0 0
        %907 = vmatpush.bf16.msra.mxu0 0
        %908 = vmatpush.bf16.msra.mxu0 0
        %909 = vmatpush.bf16.msra.mxu0 0
        %910 = vmatpush.bf16.msra.mxu0 %v866
        %911 = vmatmul.bf16.gmra.mxu0 %v875
        %v912 = vpop.f32.mrf.mxu0
        %v913 = vadd.f32 %v871, %v912
        %v914 = vpop.f32.mrf.mxu0
        %915 = vdwg.mxu0
        %v916 = vsub.f32 0.0, %v887
        %v917 = vsub.f32 0.0, %v900
        %v918 = vsub.f32 0.0, %v913
        %v919 = vmul.f32 %v916, 1.442695
        %v920 = vpow.pop %v919
        %v921 = vmul.f32 %v917, 1.442695
        %v922 = vpow.pop %v921
        %v923 = vmul.f32 %v918, 1.442695
        %v924 = vpow.pop %v923
        %v925 = vadd.f32 %v920, 1.0
        %v926 = vadd.f32 %v922, 1.0
        %v927 = vadd.f32 %v924, 1.0
        %v928 = vrcp.pop %v925
        %v929 = vrcp.pop %v926
        %v930 = vrcp.pop %v927
        %v931 = vmul.f32 %v887, %v928
        %v932 = vmul.f32 %v900, %v929
        %v933 = vmul.f32 %v913, %v930
        %v935 = vperm.slane %v365, 0
        %v936 = vperm.slane %v365, 1
        %v937 = vperm.slane %v365, 2
        %v941 = vmul.f32 %v931, %v935
        %v942 = vmul.f32 %v932, %v936
        %v943 = vmul.f32 %v933, %v937
        %v946 = vrot.slane %v942, 4
        %vm947 = vcmask 1043456
        %v948 = vsel %vm947, %v941, %v946
        %950 = vst [vmem:[#allocation2 + $0x4] sm:$0xff] %v948
        %951 = vst.msk [vmem:[#allocation2 + $0xc] sm:$0xf] %vm859, %v943
        %v952 = vld [vmem:[%s6] sm:$0xf]
        %v953 = vld [vmem:[#allocation2] sm:$0xff]
        %v954 = vld [vmem:[#allocation2 + $0x8] sm:$0xff]
        %s955 = scalar_lea.vmem %s6, 4
        %v956 = vld [vmem:[%s955] sm:$0xf]
        %959 = vst [vmem:[#allocation1] ss:$2 sm:$0xff] %v953
        %s960 = scalar_lea.vmem [#allocation1], 16
        %961 = vst [vmem:[%s960] ss:$2 sm:$0xff] %v954
        %v962 = vld.sshfl [vmem:[#allocation1] sm:$0xff pattern:$0x75316420]
        %v963 = vld.sshfl [vmem:[#allocation1 + $0x8] sm:$0xff pattern:$0x75316420]
        %v964 = vld.sshfl [vmem:[#allocation1 + $0x10] sm:$0xff pattern:$0x75316420]
        %v965 = vld.sshfl [vmem:[#allocation1 + $0x18] sm:$0xff pattern:$0x75316420]
        %966 = vrot.lane.b32.xlu0 %v962, 18
        %v967 = vpop.permute.xlu0 %966
        %968 = vrot.lane.b32.xlu0 %v963, 18
        %v969 = vpop.permute.xlu0 %968
        %970 = vrot.lane.b32.xlu0 %v964, 18
        %v971 = vpop.permute.xlu0 %970
        %972 = vrot.lane.b32.xlu0 %v965, 18
        %v973 = vpop.permute.xlu0 %972
        %vm974 = vcmask 146432
        %v975 = vsel %vm974, %v967, %v969
        %v976 = vsel %vm974, %v969, %v971
        %v977 = vsel %vm974, %v971, %v973
        %vm978 = vcmask 31744
        %v980 = vsel %vm978, %v956, 0
        %v982 = vsel %vm947, %v975, 0
        %v984 = vsel %vm947, %v976, 0
        %v986 = vsel %vm947, %v977, 0
        %988 = vmatpush.msra.mxu0 0.0
        %989 = vmatpush.msra.mxu0 0.0
        %990 = vmatpush.msra.mxu0 0.0
        %991 = vmatpush.msra.mxu0 0.0
        %992 = vmatpush.msra.mxu0 0.0
        %993 = vmatpush.msra.mxu0 0.0
        %994 = vmatpush.msra.mxu0 0.0
        %995 = vmatpush.msra.mxu0 0.0
        %996 = vmatpush.msra.mxu0 0.0
        %997 = vmatpush.msra.mxu0 0.0
        %998 = vmatpush.msra.mxu0 0.0
        %999 = vmatpush.msra.mxu0 0.0
        %1000 = vmatpush.msra.mxu0 0.0
        %1001 = vmatpush.msra.mxu0 0.0
        %1002 = vmatpush.msra.mxu0 0.0
        %1003 = vmatpush.msra.mxu0 %v982
        %1004 = vmatmul.bf16.gmra.mxu0 %v980
        %v1005 = vpop.f32.mrf.mxu0
        %v1006 = vadd.f32 0.0, %v1005
        %v1007 = vpop.f32.mrf.mxu0
        %1008 = vdwg.mxu0
        %1009 = vmatpush.msra.mxu0 0.0
        %1010 = vmatpush.msra.mxu0 0.0
        %1011 = vmatpush.msra.mxu0 0.0
        %1012 = vmatpush.msra.mxu0 0.0
        %1013 = vmatpush.msra.mxu0 0.0
        %1014 = vmatpush.msra.mxu0 0.0
        %1015 = vmatpush.msra.mxu0 0.0
        %1016 = vmatpush.msra.mxu0 0.0
        %1017 = vmatpush.msra.mxu0 0.0
        %1018 = vmatpush.msra.mxu0 0.0
        %1019 = vmatpush.msra.mxu0 0.0
        %1020 = vmatpush.msra.mxu0 0.0
        %1021 = vmatpush.msra.mxu0 0.0
        %1022 = vmatpush.msra.mxu0 0.0
        %1023 = vmatpush.msra.mxu0 0.0
        %1024 = vmatpush.msra.mxu0 %v984
        %1025 = vmatmul.bf16.gmra.mxu0 %v980
        %v1026 = vpop.f32.mrf.mxu0
        %v1027 = vadd.f32 0.0, %v1026
        %v1028 = vpop.f32.mrf.mxu0
        %1029 = vdwg.mxu0
        %1030 = vmatpush.msra.mxu0 0.0
        %1031 = vmatpush.msra.mxu0 0.0
        %1032 = vmatpush.msra.mxu0 0.0
        %1033 = vmatpush.msra.mxu0 0.0
        %1034 = vmatpush.msra.mxu0 0.0
        %1035 = vmatpush.msra.mxu0 0.0
        %1036 = vmatpush.msra.mxu0 0.0
        %1037 = vmatpush.msra.mxu0 0.0
        %1038 = vmatpush.msra.mxu0 0.0
        %1039 = vmatpush.msra.mxu0 0.0
        %1040 = vmatpush.msra.mxu0 0.0
        %1041 = vmatpush.msra.mxu0 0.0
        %1042 = vmatpush.msra.mxu0 0.0
        %1043 = vmatpush.msra.mxu0 0.0
        %1044 = vmatpush.msra.mxu0 0.0
        %1045 = vmatpush.msra.mxu0 %v986
        %1046 = vmatmul.bf16.gmra.mxu0 %v980
        %v1047 = vpop.f32.mrf.mxu0
        %v1048 = vadd.f32 0.0, %v1047
        %v1049 = vpop.f32.mrf.mxu0
        %1050 = vdwg.mxu0
        %1051 = vst [vmem:[#allocation1] ss:$2 sm:$0xff] %v953
        %s1052 = scalar_lea.vmem [#allocation1], 16
        %1053 = vst [vmem:[%s1052] ss:$2 sm:$0xff] %v954
        %v1054 = vld.sshfl [vmem:[#allocation1] sm:$0xff pattern:$0x75316420]
        %v1055 = vld.sshfl [vmem:[#allocation1 + $0x8] sm:$0xff pattern:$0x75316420]
        %v1056 = vld.sshfl [vmem:[#allocation1 + $0x10] sm:$0xff pattern:$0x75316420]
        %v1057 = vld.sshfl [vmem:[#allocation1 + $0x18] sm:$0xff pattern:$0x75316420]
        %1058 = vrot.lane.b32.xlu0 %v1054, 19
        %v1059 = vpop.permute.xlu0 %1058
        %1060 = vrot.lane.b32.xlu0 %v1055, 19
        %v1061 = vpop.permute.xlu0 %1060
        %1062 = vrot.lane.b32.xlu0 %v1056, 19
        %v1063 = vpop.permute.xlu0 %1062
        %1064 = vrot.lane.b32.xlu0 %v1057, 19
        %v1065 = vpop.permute.xlu0 %1064
        %vm1066 = vcmask 154624
        %v1067 = vsel %vm1066, %v1059, %v1061
        %v1068 = vsel %vm1066, %v1061, %v1063
        %v1069 = vsel %vm1066, %v1063, %v1065
        %v1071 = vsel %vm978, %v952, 0
        %v1073 = vsel %vm947, %v1067, 0
        %v1075 = vsel %vm947, %v1068, 0
        %v1077 = vsel %vm947, %v1069, 0
        %1079 = vmatpush.msra.mxu0 0.0
        %1080 = vmatpush.msra.mxu0 0.0
        %1081 = vmatpush.msra.mxu0 0.0
        %1082 = vmatpush.msra.mxu0 0.0
        %1083 = vmatpush.msra.mxu0 0.0
        %1084 = vmatpush.msra.mxu0 0.0
        %1085 = vmatpush.msra.mxu0 0.0
        %1086 = vmatpush.msra.mxu0 0.0
        %1087 = vmatpush.msra.mxu0 0.0
        %1088 = vmatpush.msra.mxu0 0.0
        %1089 = vmatpush.msra.mxu0 0.0
        %1090 = vmatpush.msra.mxu0 0.0
        %1091 = vmatpush.msra.mxu0 0.0
        %1092 = vmatpush.msra.mxu0 0.0
        %1093 = vmatpush.msra.mxu0 0.0
        %1094 = vmatpush.msra.mxu0 %v1073
        %1095 = vmatmul.bf16.gmra.mxu0 %v1071
        %v1096 = vpop.f32.mrf.mxu0
        %v1097 = vadd.f32 %v1006, %v1096
        %v1098 = vpop.f32.mrf.mxu0
        %1099 = vdwg.mxu0
        %1100 = vmatpush.msra.mxu0 0.0
        %1101 = vmatpush.msra.mxu0 0.0
        %1102 = vmatpush.msra.mxu0 0.0
        %1103 = vmatpush.msra.mxu0 0.0
        %1104 = vmatpush.msra.mxu0 0.0
        %1105 = vmatpush.msra.mxu0 0.0
        %1106 = vmatpush.msra.mxu0 0.0
        %1107 = vmatpush.msra.mxu0 0.0
        %1108 = vmatpush.msra.mxu0 0.0
        %1109 = vmatpush.msra.mxu0 0.0
        %1110 = vmatpush.msra.mxu0 0.0
        %1111 = vmatpush.msra.mxu0 0.0
        %1112 = vmatpush.msra.mxu0 0.0
        %1113 = vmatpush.msra.mxu0 0.0
        %1114 = vmatpush.msra.mxu0 0.0
        %1115 = vmatpush.msra.mxu0 %v1075
        %1116 = vmatmul.bf16.gmra.mxu0 %v1071
        %v1117 = vpop.f32.mrf.mxu0
        %v1118 = vadd.f32 %v1027, %v1117
        %v1119 = vpop.f32.mrf.mxu0
        %1120 = vdwg.mxu0
        %1121 = vmatpush.msra.mxu0 0.0
        %1122 = vmatpush.msra.mxu0 0.0
        %1123 = vmatpush.msra.mxu0 0.0
        %1124 = vmatpush.msra.mxu0 0.0
        %1125 = vmatpush.msra.mxu0 0.0
        %1126 = vmatpush.msra.mxu0 0.0
        %1127 = vmatpush.msra.mxu0 0.0
        %1128 = vmatpush.msra.mxu0 0.0
        %1129 = vmatpush.msra.mxu0 0.0
        %1130 = vmatpush.msra.mxu0 0.0
        %1131 = vmatpush.msra.mxu0 0.0
        %1132 = vmatpush.msra.mxu0 0.0
        %1133 = vmatpush.msra.mxu0 0.0
        %1134 = vmatpush.msra.mxu0 0.0
        %1135 = vmatpush.msra.mxu0 0.0
        %1136 = vmatpush.msra.mxu0 %v1077
        %1137 = vmatmul.bf16.gmra.mxu0 %v1071
        %v1138 = vpop.f32.mrf.mxu0
        %v1139 = vadd.f32 %v1048, %v1138
        %v1140 = vpop.f32.mrf.mxu0
        %1141 = vdwg.mxu0
        %s1142 = scalar_lea.vmem %s6, 8
        %v1143 = vld [vmem:[%s1142] sm:$0xf]
        %v1144 = vld [vmem:[#allocation2] sm:$0xff]
        %v1145 = vld [vmem:[#allocation2 + $0x8] sm:$0xff]
        %1148 = vst [vmem:[#allocation1] ss:$2 sm:$0xff] %v1144
        %s1149 = scalar_lea.vmem [#allocation1], 16
        %1150 = vst [vmem:[%s1149] ss:$2 sm:$0xff] %v1145
        %v1151 = vld.sshfl [vmem:[#allocation1] sm:$0xff pattern:$0x75316420]
        %v1152 = vld.sshfl [vmem:[#allocation1 + $0x8] sm:$0xff pattern:$0x75316420]
        %v1153 = vld.sshfl [vmem:[#allocation1 + $0x10] sm:$0xff pattern:$0x75316420]
        %v1154 = vld.sshfl [vmem:[#allocation1 + $0x18] sm:$0xff pattern:$0x75316420]
        %1155 = vrot.lane.b32.xlu0 %v1151, 17
        %v1156 = vpop.permute.xlu0 %1155
        %1157 = vrot.lane.b32.xlu0 %v1152, 17
        %v1158 = vpop.permute.xlu0 %1157
        %1159 = vrot.lane.b32.xlu0 %v1153, 17
        %v1160 = vpop.permute.xlu0 %1159
        %1161 = vrot.lane.b32.xlu0 %v1154, 17
        %v1162 = vpop.permute.xlu0 %1161
        %vm1163 = vcmask 138240
        %v1164 = vsel %vm1163, %v1156, %v1158
        %v1165 = vsel %vm1163, %v1158, %v1160
        %v1166 = vsel %vm1163, %v1160, %v1162
        %v1168 = vsel %vm978, %v1143, 0
        %v1170 = vsel %vm947, %v1164, 0
        %v1172 = vsel %vm947, %v1165, 0
        %v1174 = vsel %vm947, %v1166, 0
        %1176 = vmatpush.msra.mxu0 0.0
        %1177 = vmatpush.msra.mxu0 0.0
        %1178 = vmatpush.msra.mxu0 0.0
        %1179 = vmatpush.msra.mxu0 0.0
        %1180 = vmatpush.msra.mxu0 0.0
        %1181 = vmatpush.msra.mxu0 0.0
        %1182 = vmatpush.msra.mxu0 0.0
        %1183 = vmatpush.msra.mxu0 0.0
        %1184 = vmatpush.msra.mxu0 0.0
        %1185 = vmatpush.msra.mxu0 0.0
        %1186 = vmatpush.msra.mxu0 0.0
        %1187 = vmatpush.msra.mxu0 0.0
        %1188 = vmatpush.msra.mxu0 0.0
        %1189 = vmatpush.msra.mxu0 0.0
        %1190 = vmatpush.msra.mxu0 0.0
        %1191 = vmatpush.msra.mxu0 %v1170
        %1192 = vmatmul.bf16.gmra.mxu0 %v1168
        %v1193 = vpop.f32.mrf.mxu0
        %v1194 = vadd.f32 0.0, %v1193
        %v1195 = vpop.f32.mrf.mxu0
        %1196 = vdwg.mxu0
        %1197 = vmatpush.msra.mxu0 0.0
        %1198 = vmatpush.msra.mxu0 0.0
        %1199 = vmatpush.msra.mxu0 0.0
        %1200 = vmatpush.msra.mxu0 0.0
        %1201 = vmatpush.msra.mxu0 0.0
        %1202 = vmatpush.msra.mxu0 0.0
        %1203 = vmatpush.msra.mxu0 0.0
        %1204 = vmatpush.msra.mxu0 0.0
        %1205 = vmatpush.msra.mxu0 0.0
        %1206 = vmatpush.msra.mxu0 0.0
        %1207 = vmatpush.msra.mxu0 0.0
        %1208 = vmatpush.msra.mxu0 0.0
        %1209 = vmatpush.msra.mxu0 0.0
        %1210 = vmatpush.msra.mxu0 0.0
        %1211 = vmatpush.msra.mxu0 0.0
        %1212 = vmatpush.msra.mxu0 %v1172
        %1213 = vmatmul.bf16.gmra.mxu0 %v1168
        %v1214 = vpop.f32.mrf.mxu0
        %v1215 = vadd.f32 0.0, %v1214
        %v1216 = vpop.f32.mrf.mxu0
        %1217 = vdwg.mxu0
        %1218 = vmatpush.msra.mxu0 0.0
        %1219 = vmatpush.msra.mxu0 0.0
        %1220 = vmatpush.msra.mxu0 0.0
        %1221 = vmatpush.msra.mxu0 0.0
        %1222 = vmatpush.msra.mxu0 0.0
        %1223 = vmatpush.msra.mxu0 0.0
        %1224 = vmatpush.msra.mxu0 0.0
        %1225 = vmatpush.msra.mxu0 0.0
        %1226 = vmatpush.msra.mxu0 0.0
        %1227 = vmatpush.msra.mxu0 0.0
        %1228 = vmatpush.msra.mxu0 0.0
        %1229 = vmatpush.msra.mxu0 0.0
        %1230 = vmatpush.msra.mxu0 0.0
        %1231 = vmatpush.msra.mxu0 0.0
        %1232 = vmatpush.msra.mxu0 0.0
        %1233 = vmatpush.msra.mxu0 %v1174
        %1234 = vmatmul.bf16.gmra.mxu0 %v1168
        %v1235 = vpop.f32.mrf.mxu0
        %v1236 = vadd.f32 0.0, %v1235
        %v1237 = vpop.f32.mrf.mxu0
        %1238 = vdwg.mxu0
        %v1239 = vadd.f32 %v1097, %v1194
        %v1240 = vadd.f32 %v1118, %v1215
        %v1241 = vadd.f32 %v1139, %v1236
        %s1242 = scalar_lea.vmem %s6, 12
        %v1243 = vld [vmem:[%s1242] sm:$0xf]
        %v1244 = vld [vmem:[#allocation2] sm:$0xff]
        %v1245 = vld [vmem:[#allocation2 + $0x8] sm:$0xff]
        %1248 = vst [vmem:[#allocation1] ss:$2 sm:$0xff] %v1244
        %s1249 = scalar_lea.vmem [#allocation1], 16
        %1250 = vst [vmem:[%s1249] ss:$2 sm:$0xff] %v1245
        %v1251 = vld.sshfl [vmem:[#allocation1] sm:$0xff pattern:$0x75316420]
        %v1252 = vld.sshfl [vmem:[#allocation1 + $0x8] sm:$0xff pattern:$0x75316420]
        %v1253 = vld.sshfl [vmem:[#allocation1 + $0x10] sm:$0xff pattern:$0x75316420]
        %v1254 = vld.sshfl [vmem:[#allocation1 + $0x18] sm:$0xff pattern:$0x75316420]
        %1255 = vrot.lane.b32.xlu0 %v1251, 1
        %v1256 = vpop.permute.xlu0 %1255
        %1257 = vrot.lane.b32.xlu0 %v1252, 1
        %v1258 = vpop.permute.xlu0 %1257
        %1259 = vrot.lane.b32.xlu0 %v1253, 1
        %v1260 = vpop.permute.xlu0 %1259
        %1261 = vrot.lane.b32.xlu0 %v1254, 1
        %v1262 = vpop.permute.xlu0 %1261
        %vm1263 = vcmask 7168
        %v1264 = vsel %vm1263, %v1256, %v1258
        %v1265 = vsel %vm1263, %v1258, %v1260
        %v1266 = vsel %vm1263, %v1260, %v1262
        %v1268 = vsel %vm978, %v1243, 0
        %v1270 = vsel %vm947, %v1264, 0
        %v1272 = vsel %vm947, %v1265, 0
        %v1274 = vsel %vm947, %v1266, 0
        %1276 = vmatpush.msra.mxu0 0.0
        %1277 = vmatpush.msra.mxu0 0.0
        %1278 = vmatpush.msra.mxu0 0.0
        %1279 = vmatpush.msra.mxu0 0.0
        %1280 = vmatpush.msra.mxu0 0.0
        %1281 = vmatpush.msra.mxu0 0.0
        %1282 = vmatpush.msra.mxu0 0.0
        %1283 = vmatpush.msra.mxu0 0.0
        %1284 = vmatpush.msra.mxu0 0.0
        %1285 = vmatpush.msra.mxu0 0.0
        %1286 = vmatpush.msra.mxu0 0.0
        %1287 = vmatpush.msra.mxu0 0.0
        %1288 = vmatpush.msra.mxu0 0.0
        %1289 = vmatpush.msra.mxu0 0.0
        %1290 = vmatpush.msra.mxu0 0.0
        %1291 = vmatpush.msra.mxu0 %v1270
        %1292 = vmatmul.bf16.gmra.mxu0 %v1268
        %v1293 = vpop.f32.mrf.mxu0
        %v1294 = vadd.f32 0.0, %v1293
        %v1295 = vpop.f32.mrf.mxu0
        %1296 = vdwg.mxu0
        %1297 = vmatpush.msra.mxu0 0.0
        %1298 = vmatpush.msra.mxu0 0.0
        %1299 = vmatpush.msra.mxu0 0.0
        %1300 = vmatpush.msra.mxu0 0.0
        %1301 = vmatpush.msra.mxu0 0.0
        %1302 = vmatpush.msra.mxu0 0.0
        %1303 = vmatpush.msra.mxu0 0.0
        %1304 = vmatpush.msra.mxu0 0.0
        %1305 = vmatpush.msra.mxu0 0.0
        %1306 = vmatpush.msra.mxu0 0.0
        %1307 = vmatpush.msra.mxu0 0.0
        %1308 = vmatpush.msra.mxu0 0.0
        %1309 = vmatpush.msra.mxu0 0.0
        %1310 = vmatpush.msra.mxu0 0.0
        %1311 = vmatpush.msra.mxu0 0.0
        %1312 = vmatpush.msra.mxu0 %v1272
        %1313 = vmatmul.bf16.gmra.mxu0 %v1268
        %v1314 = vpop.f32.mrf.mxu0
        %v1315 = vadd.f32 0.0, %v1314
        %v1316 = vpop.f32.mrf.mxu0
        %1317 = vdwg.mxu0
        %1318 = vmatpush.msra.mxu0 0.0
        %1319 = vmatpush.msra.mxu0 0.0
        %1320 = vmatpush.msra.mxu0 0.0
        %1321 = vmatpush.msra.mxu0 0.0
        %1322 = vmatpush.msra.mxu0 0.0
        %1323 = vmatpush.msra.mxu0 0.0
        %1324 = vmatpush.msra.mxu0 0.0
        %1325 = vmatpush.msra.mxu0 0.0
        %1326 = vmatpush.msra.mxu0 0.0
        %1327 = vmatpush.msra.mxu0 0.0
        %1328 = vmatpush.msra.mxu0 0.0
        %1329 = vmatpush.msra.mxu0 0.0
        %1330 = vmatpush.msra.mxu0 0.0
        %1331 = vmatpush.msra.mxu0 0.0
        %1332 = vmatpush.msra.mxu0 0.0
        %1333 = vmatpush.msra.mxu0 %v1274
        %1334 = vmatmul.bf16.gmra.mxu0 %v1268
        %v1335 = vpop.f32.mrf.mxu0
        %v1336 = vadd.f32 0.0, %v1335
        %v1337 = vpop.f32.mrf.mxu0
        %1338 = vdwg.mxu0
        %v1339 = vadd.f32 %v1239, %v1294
        %v1340 = vadd.f32 %v1240, %v1315
        %v1341 = vadd.f32 %v1241, %v1336
        %s1342 = scalar_lea.vmem %s6, 16
        %v1343 = vld [vmem:[%s1342] sm:$0xf]
        %v1344 = vld [vmem:[#allocation2 + $0x4] sm:$0xff]
        %v1345 = vld [vmem:[#allocation2 + $0xc] sm:$0xf]
        %1348 = vst [vmem:[#allocation1] ss:$2 sm:$0xff] %v1344
        %s1349 = scalar_lea.vmem [#allocation1], 16
        %1350 = vst [vmem:[%s1349] ss:$2 sm:$0xff] %v1345
        %v1351 = vld.sshfl [vmem:[#allocation1] sm:$0xff pattern:$0x75316420]
        %v1352 = vld.sshfl [vmem:[#allocation1 + $0x8] sm:$0xff pattern:$0x75316420]
        %v1353 = vld.sshfl [vmem:[#allocation1 + $0x10] sm:$0xff pattern:$0x75316420]
        %v1355 = vsel %vm978, %v1343, 0
        %v1357 = vsel %vm947, %v1351, 0
        %v1359 = vsel %vm947, %v1352, 0
        %v1361 = vsel %vm947, %v1353, 0
        %1363 = vmatpush.msra.mxu0 0.0
        %1364 = vmatpush.msra.mxu0 0.0
        %1365 = vmatpush.msra.mxu0 0.0
        %1366 = vmatpush.msra.mxu0 0.0
        %1367 = vmatpush.msra.mxu0 0.0
        %1368 = vmatpush.msra.mxu0 0.0
        %1369 = vmatpush.msra.mxu0 0.0
        %1370 = vmatpush.msra.mxu0 0.0
        %1371 = vmatpush.msra.mxu0 0.0
        %1372 = vmatpush.msra.mxu0 0.0
        %1373 = vmatpush.msra.mxu0 0.0
        %1374 = vmatpush.msra.mxu0 0.0
        %1375 = vmatpush.msra.mxu0 0.0
        %1376 = vmatpush.msra.mxu0 0.0
        %1377 = vmatpush.msra.mxu0 0.0
        %1378 = vmatpush.msra.mxu0 %v1357
        %1379 = vmatmul.bf16.gmra.mxu0 %v1355
        %v1380 = vpop.f32.mrf.mxu0
        %v1381 = vadd.f32 0.0, %v1380
        %v1382 = vpop.f32.mrf.mxu0
        %1383 = vdwg.mxu0
        %1384 = vmatpush.msra.mxu0 0.0
        %1385 = vmatpush.msra.mxu0 0.0
        %1386 = vmatpush.msra.mxu0 0.0
        %1387 = vmatpush.msra.mxu0 0.0
        %1388 = vmatpush.msra.mxu0 0.0
        %1389 = vmatpush.msra.mxu0 0.0
        %1390 = vmatpush.msra.mxu0 0.0
        %1391 = vmatpush.msra.mxu0 0.0
        %1392 = vmatpush.msra.mxu0 0.0
        %1393 = vmatpush.msra.mxu0 0.0
        %1394 = vmatpush.msra.mxu0 0.0
        %1395 = vmatpush.msra.mxu0 0.0
        %1396 = vmatpush.msra.mxu0 0.0
        %1397 = vmatpush.msra.mxu0 0.0
        %1398 = vmatpush.msra.mxu0 0.0
        %1399 = vmatpush.msra.mxu0 %v1359
        %1400 = vmatmul.bf16.gmra.mxu0 %v1355
        %v1401 = vpop.f32.mrf.mxu0
        %v1402 = vadd.f32 0.0, %v1401
        %v1403 = vpop.f32.mrf.mxu0
        %1404 = vdwg.mxu0
        %1405 = vmatpush.msra.mxu0 0.0
        %1406 = vmatpush.msra.mxu0 0.0
        %1407 = vmatpush.msra.mxu0 0.0
        %1408 = vmatpush.msra.mxu0 0.0
        %1409 = vmatpush.msra.mxu0 0.0
        %1410 = vmatpush.msra.mxu0 0.0
        %1411 = vmatpush.msra.mxu0 0.0
        %1412 = vmatpush.msra.mxu0 0.0
        %1413 = vmatpush.msra.mxu0 0.0
        %1414 = vmatpush.msra.mxu0 0.0
        %1415 = vmatpush.msra.mxu0 0.0
        %1416 = vmatpush.msra.mxu0 0.0
        %1417 = vmatpush.msra.mxu0 0.0
        %1418 = vmatpush.msra.mxu0 0.0
        %1419 = vmatpush.msra.mxu0 0.0
        %1420 = vmatpush.msra.mxu0 %v1361
        %1421 = vmatmul.bf16.gmra.mxu0 %v1355
        %v1422 = vpop.f32.mrf.mxu0
        %v1423 = vadd.f32 0.0, %v1422
        %v1424 = vpop.f32.mrf.mxu0
        %1425 = vdwg.mxu0
        %v1426 = vadd.f32 %v1339, %v1381
        %v1427 = vadd.f32 %v1340, %v1402
        %v1428 = vadd.f32 %v1341, %v1423
        %s1429 = scalar_lea.vmem %s6, 20
        %v1430 = vld [vmem:[%s1429] sm:$0xf]
        %v1431 = vld [vmem:[#allocation2 + $0x4] sm:$0xff]
        %v1432 = vld [vmem:[#allocation2 + $0xc] sm:$0xf]
        %1435 = vst [vmem:[#allocation1] ss:$2 sm:$0xff] %v1431
        %s1436 = scalar_lea.vmem [#allocation1], 16
        %1437 = vst [vmem:[%s1436] ss:$2 sm:$0xff] %v1432
        %v1438 = vld.sshfl [vmem:[#allocation1] sm:$0xff pattern:$0x75316420]
        %v1439 = vld.sshfl [vmem:[#allocation1 + $0x8] sm:$0xff pattern:$0x75316420]
        %v1440 = vld.sshfl [vmem:[#allocation1 + $0x10] sm:$0xff pattern:$0x75316420]
        %1441 = vrot.lane.b32.xlu0 %v1438, 127
        %v1442 = vpop.permute.xlu0 %1441
        %1443 = vrot.lane.b32.xlu0 %v1439, 127
        %v1444 = vpop.permute.xlu0 %1443
        %1445 = vrot.lane.b32.xlu0 %v1440, 127
        %v1446 = vpop.permute.xlu0 %1445
        %v1447 = vsel %vm560, %v1442, %v1444
        %v1448 = vsel %vm560, %v1444, %v1446
        %v1450 = vsel %vm978, %v1430, 0
        %v1452 = vsel %vm947, %v1447, 0
        %v1454 = vsel %vm947, %v1448, 0
        %v1456 = vsel %vm947, %v1446, 0
        %1458 = vmatpush.msra.mxu0 0.0
        %1459 = vmatpush.msra.mxu0 0.0
        %1460 = vmatpush.msra.mxu0 0.0
        %1461 = vmatpush.msra.mxu0 0.0
        %1462 = vmatpush.msra.mxu0 0.0
        %1463 = vmatpush.msra.mxu0 0.0
        %1464 = vmatpush.msra.mxu0 0.0
        %1465 = vmatpush.msra.mxu0 0.0
        %1466 = vmatpush.msra.mxu0 0.0
        %1467 = vmatpush.msra.mxu0 0.0
        %1468 = vmatpush.msra.mxu0 0.0
        %1469 = vmatpush.msra.mxu0 0.0
        %1470 = vmatpush.msra.mxu0 0.0
        %1471 = vmatpush.msra.mxu0 0.0
        %1472 = vmatpush.msra.mxu0 0.0
        %1473 = vmatpush.msra.mxu0 %v1452
        %1474 = vmatmul.bf16.gmra.mxu0 %v1450
        %v1475 = vpop.f32.mrf.mxu0
        %v1476 = vadd.f32 0.0, %v1475
        %v1477 = vpop.f32.mrf.mxu0
        %1478 = vdwg.mxu0
        %1479 = vmatpush.msra.mxu0 0.0
        %1480 = vmatpush.msra.mxu0 0.0
        %1481 = vmatpush.msra.mxu0 0.0
        %1482 = vmatpush.msra.mxu0 0.0
        %1483 = vmatpush.msra.mxu0 0.0
        %1484 = vmatpush.msra.mxu0 0.0
        %1485 = vmatpush.msra.mxu0 0.0
        %1486 = vmatpush.msra.mxu0 0.0
        %1487 = vmatpush.msra.mxu0 0.0
        %1488 = vmatpush.msra.mxu0 0.0
        %1489 = vmatpush.msra.mxu0 0.0
        %1490 = vmatpush.msra.mxu0 0.0
        %1491 = vmatpush.msra.mxu0 0.0
        %1492 = vmatpush.msra.mxu0 0.0
        %1493 = vmatpush.msra.mxu0 0.0
        %1494 = vmatpush.msra.mxu0 %v1454
        %1495 = vmatmul.bf16.gmra.mxu0 %v1450
        %v1496 = vpop.f32.mrf.mxu0
        %v1497 = vadd.f32 0.0, %v1496
        %v1498 = vpop.f32.mrf.mxu0
        %1499 = vdwg.mxu0
        %1500 = vmatpush.msra.mxu0 0.0
        %1501 = vmatpush.msra.mxu0 0.0
        %1502 = vmatpush.msra.mxu0 0.0
        %1503 = vmatpush.msra.mxu0 0.0
        %1504 = vmatpush.msra.mxu0 0.0
        %1505 = vmatpush.msra.mxu0 0.0
        %1506 = vmatpush.msra.mxu0 0.0
        %1507 = vmatpush.msra.mxu0 0.0
        %1508 = vmatpush.msra.mxu0 0.0
        %1509 = vmatpush.msra.mxu0 0.0
        %1510 = vmatpush.msra.mxu0 0.0
        %1511 = vmatpush.msra.mxu0 0.0
        %1512 = vmatpush.msra.mxu0 0.0
        %1513 = vmatpush.msra.mxu0 0.0
        %1514 = vmatpush.msra.mxu0 0.0
        %1515 = vmatpush.msra.mxu0 %v1456
        %1516 = vmatmul.bf16.gmra.mxu0 %v1450
        %v1517 = vpop.f32.mrf.mxu0
        %v1518 = vadd.f32 0.0, %v1517
        %v1519 = vpop.f32.mrf.mxu0
        %1520 = vdwg.mxu0
        %v1521 = vadd.f32 %v1426, %v1476
        %v1522 = vadd.f32 %v1427, %v1497
        %v1523 = vadd.f32 %v1428, %v1518
        %s1524 = scalar_lea.vmem %s6, 24
        %v1525 = vld [vmem:[%s1524] sm:$0xf]
        %v1526 = vld [vmem:[#allocation2 + $0x4] sm:$0xff]
        %v1527 = vld [vmem:[#allocation2 + $0xc] sm:$0xf]
        %1530 = vst [vmem:[#allocation1] ss:$2 sm:$0xff] %v1526
        %s1531 = scalar_lea.vmem [#allocation1], 16
        %1532 = vst [vmem:[%s1531] ss:$2 sm:$0xff] %v1527
        %v1533 = vld.sshfl [vmem:[#allocation1] sm:$0xff pattern:$0x75316420]
        %v1534 = vld.sshfl [vmem:[#allocation1 + $0x8] sm:$0xff pattern:$0x75316420]
        %v1535 = vld.sshfl [vmem:[#allocation1 + $0x10] sm:$0xff pattern:$0x75316420]
        %1536 = vrot.lane.b32.xlu0 %v1533, 111
        %v1537 = vpop.permute.xlu0 %1536
        %1538 = vrot.lane.b32.xlu0 %v1534, 111
        %v1539 = vpop.permute.xlu0 %1538
        %1540 = vrot.lane.b32.xlu0 %v1535, 111
        %v1541 = vpop.permute.xlu0 %1540
        %vm1542 = vcmask 908288
        %v1543 = vsel %vm1542, %v1537, %v1539
        %v1544 = vsel %vm1542, %v1539, %v1541
        %v1546 = vsel %vm978, %v1525, 0
        %v1548 = vsel %vm947, %v1543, 0
        %v1550 = vsel %vm947, %v1544, 0
        %v1552 = vsel %vm947, %v1541, 0
        %1554 = vmatpush.msra.mxu0 0.0
        %1555 = vmatpush.msra.mxu0 0.0
        %1556 = vmatpush.msra.mxu0 0.0
        %1557 = vmatpush.msra.mxu0 0.0
        %1558 = vmatpush.msra.mxu0 0.0
        %1559 = vmatpush.msra.mxu0 0.0
        %1560 = vmatpush.msra.mxu0 0.0
        %1561 = vmatpush.msra.mxu0 0.0
        %1562 = vmatpush.msra.mxu0 0.0
        %1563 = vmatpush.msra.mxu0 0.0
        %1564 = vmatpush.msra.mxu0 0.0
        %1565 = vmatpush.msra.mxu0 0.0
        %1566 = vmatpush.msra.mxu0 0.0
        %1567 = vmatpush.msra.mxu0 0.0
        %1568 = vmatpush.msra.mxu0 0.0
        %1569 = vmatpush.msra.mxu0 %v1548
        %1570 = vmatmul.bf16.gmra.mxu0 %v1546
        %v1571 = vpop.f32.mrf.mxu0
        %v1572 = vadd.f32 0.0, %v1571
        %v1573 = vpop.f32.mrf.mxu0
        %1574 = vdwg.mxu0
        %1575 = vmatpush.msra.mxu0 0.0
        %1576 = vmatpush.msra.mxu0 0.0
        %1577 = vmatpush.msra.mxu0 0.0
        %1578 = vmatpush.msra.mxu0 0.0
        %1579 = vmatpush.msra.mxu0 0.0
        %1580 = vmatpush.msra.mxu0 0.0
        %1581 = vmatpush.msra.mxu0 0.0
        %1582 = vmatpush.msra.mxu0 0.0
        %1583 = vmatpush.msra.mxu0 0.0
        %1584 = vmatpush.msra.mxu0 0.0
        %1585 = vmatpush.msra.mxu0 0.0
        %1586 = vmatpush.msra.mxu0 0.0
        %1587 = vmatpush.msra.mxu0 0.0
        %1588 = vmatpush.msra.mxu0 0.0
        %1589 = vmatpush.msra.mxu0 0.0
        %1590 = vmatpush.msra.mxu0 %v1550
        %1591 = vmatmul.bf16.gmra.mxu0 %v1546
        %v1592 = vpop.f32.mrf.mxu0
        %v1593 = vadd.f32 0.0, %v1592
        %v1594 = vpop.f32.mrf.mxu0
        %1595 = vdwg.mxu0
        %1596 = vmatpush.msra.mxu0 0.0
        %1597 = vmatpush.msra.mxu0 0.0
        %1598 = vmatpush.msra.mxu0 0.0
        %1599 = vmatpush.msra.mxu0 0.0
        %1600 = vmatpush.msra.mxu0 0.0
        %1601 = vmatpush.msra.mxu0 0.0
        %1602 = vmatpush.msra.mxu0 0.0
        %1603 = vmatpush.msra.mxu0 0.0
        %1604 = vmatpush.msra.mxu0 0.0
        %1605 = vmatpush.msra.mxu0 0.0
        %1606 = vmatpush.msra.mxu0 0.0
        %1607 = vmatpush.msra.mxu0 0.0
        %1608 = vmatpush.msra.mxu0 0.0
        %1609 = vmatpush.msra.mxu0 0.0
        %1610 = vmatpush.msra.mxu0 0.0
        %1611 = vmatpush.msra.mxu0 %v1552
        %1612 = vmatmul.bf16.gmra.mxu0 %v1546
        %v1613 = vpop.f32.mrf.mxu0
        %v1614 = vadd.f32 0.0, %v1613
        %v1615 = vpop.f32.mrf.mxu0
        %1616 = vdwg.mxu0
        %v1617 = vadd.f32 %v1521, %v1572
        %v1618 = vadd.f32 %v1522, %v1593
        %v1619 = vadd.f32 %v1523, %v1614
        %s1620 = scalar_lea.vmem %s6, 28
        %v1621 = vld [vmem:[%s1620] sm:$0xf]
        %v1622 = vld [vmem:[#allocation2 + $0x4] sm:$0xff]
        %v1623 = vld [vmem:[#allocation2 + $0xc] sm:$0xf]
        %1626 = vst [vmem:[#allocation1] ss:$2 sm:$0xff] %v1622
        %s1627 = scalar_lea.vmem [#allocation1], 16
        %1628 = vst [vmem:[%s1627] ss:$2 sm:$0xff] %v1623
        %v1629 = vld.sshfl [vmem:[#allocation1] sm:$0xff pattern:$0x75316420]
        %v1630 = vld.sshfl [vmem:[#allocation1 + $0x8] sm:$0xff pattern:$0x75316420]
        %v1631 = vld.sshfl [vmem:[#allocation1 + $0x10] sm:$0xff pattern:$0x75316420]
        %1632 = vrot.lane.b32.xlu0 %v1629, 110
        %v1633 = vpop.permute.xlu0 %1632
        %1634 = vrot.lane.b32.xlu0 %v1630, 110
        %v1635 = vpop.permute.xlu0 %1634
        %1636 = vrot.lane.b32.xlu0 %v1631, 110
        %v1637 = vpop.permute.xlu0 %1636
        %v1638 = vsel %vm638, %v1633, %v1635
        %v1639 = vsel %vm638, %v1635, %v1637
        %v1641 = vsel %vm978, %v1621, 0
        %v1643 = vsel %vm947, %v1638, 0
        %v1645 = vsel %vm947, %v1639, 0
        %v1647 = vsel %vm947, %v1637, 0
        %1649 = vmatpush.msra.mxu0 0.0
        %1650 = vmatpush.msra.mxu0 0.0
        %1651 = vmatpush.msra.mxu0 0.0
        %1652 = vmatpush.msra.mxu0 0.0
        %1653 = vmatpush.msra.mxu0 0.0
        %1654 = vmatpush.msra.mxu0 0.0
        %1655 = vmatpush.msra.mxu0 0.0
        %1656 = vmatpush.msra.mxu0 0.0
        %1657 = vmatpush.msra.mxu0 0.0
        %1658 = vmatpush.msra.mxu0 0.0
        %1659 = vmatpush.msra.mxu0 0.0
        %1660 = vmatpush.msra.mxu0 0.0
        %1661 = vmatpush.msra.mxu0 0.0
        %1662 = vmatpush.msra.mxu0 0.0
        %1663 = vmatpush.msra.mxu0 0.0
        %1664 = vmatpush.msra.mxu0 %v1643
        %1665 = vmatmul.bf16.gmra.mxu0 %v1641
        %v1666 = vpop.f32.mrf.mxu0
        %v1667 = vadd.f32 0.0, %v1666
        %v1668 = vpop.f32.mrf.mxu0
        %1669 = vdwg.mxu0
        %1670 = vmatpush.msra.mxu0 0.0
        %1671 = vmatpush.msra.mxu0 0.0
        %1672 = vmatpush.msra.mxu0 0.0
        %1673 = vmatpush.msra.mxu0 0.0
        %1674 = vmatpush.msra.mxu0 0.0
        %1675 = vmatpush.msra.mxu0 0.0
        %1676 = vmatpush.msra.mxu0 0.0
        %1677 = vmatpush.msra.mxu0 0.0
        %1678 = vmatpush.msra.mxu0 0.0
        %1679 = vmatpush.msra.mxu0 0.0
        %1680 = vmatpush.msra.mxu0 0.0
        %1681 = vmatpush.msra.mxu0 0.0
        %1682 = vmatpush.msra.mxu0 0.0
        %1683 = vmatpush.msra.mxu0 0.0
        %1684 = vmatpush.msra.mxu0 0.0
        %1685 = vmatpush.msra.mxu0 %v1645
        %1686 = vmatmul.bf16.gmra.mxu0 %v1641
        %v1687 = vpop.f32.mrf.mxu0
        %v1688 = vadd.f32 0.0, %v1687
        %v1689 = vpop.f32.mrf.mxu0
        %1690 = vdwg.mxu0
        %1691 = vmatpush.msra.mxu0 0.0
        %1692 = vmatpush.msra.mxu0 0.0
        %1693 = vmatpush.msra.mxu0 0.0
        %1694 = vmatpush.msra.mxu0 0.0
        %1695 = vmatpush.msra.mxu0 0.0
        %1696 = vmatpush.msra.mxu0 0.0
        %1697 = vmatpush.msra.mxu0 0.0
        %1698 = vmatpush.msra.mxu0 0.0
        %1699 = vmatpush.msra.mxu0 0.0
        %1700 = vmatpush.msra.mxu0 0.0
        %1701 = vmatpush.msra.mxu0 0.0
        %1702 = vmatpush.msra.mxu0 0.0
        %1703 = vmatpush.msra.mxu0 0.0
        %1704 = vmatpush.msra.mxu0 0.0
        %1705 = vmatpush.msra.mxu0 0.0
        %1706 = vmatpush.msra.mxu0 %v1647
        %1707 = vmatmul.bf16.gmra.mxu0 %v1641
        %v1708 = vpop.f32.mrf.mxu0
        %v1709 = vadd.f32 0.0, %v1708
        %v1710 = vpop.f32.mrf.mxu0
        %1711 = vdwg.mxu0
        %v1712 = vadd.f32 %v1617, %v1667
        %v1713 = vadd.f32 %v1618, %v1688
        %v1714 = vadd.f32 %v1619, %v1709
        %s1715 = scalar_lea.vmem %s6, 32
        %v1716 = vld [vmem:[%s1715] sm:$0xf]
        %v1717 = vld [vmem:[#allocation2 + $0x4] sm:$0xff]
        %v1718 = vld [vmem:[#allocation2 + $0xc] sm:$0xf]
        %1721 = vst [vmem:[#allocation1] ss:$2 sm:$0xff] %v1717
        %s1722 = scalar_lea.vmem [#allocation1], 16
        %1723 = vst [vmem:[%s1722] ss:$2 sm:$0xff] %v1718
        %v1724 = vld.sshfl [vmem:[#allocation1] sm:$0xff pattern:$0x75316420]
        %v1725 = vld.sshfl [vmem:[#allocation1 + $0x8] sm:$0xff pattern:$0x75316420]
        %v1726 = vld.sshfl [vmem:[#allocation1 + $0x10] sm:$0xff pattern:$0x75316420]
        %1727 = vrot.lane.b32.xlu0 %v1724, 109
        %v1728 = vpop.permute.xlu0 %1727
        %1729 = vrot.lane.b32.xlu0 %v1725, 109
        %v1730 = vpop.permute.xlu0 %1729
        %1731 = vrot.lane.b32.xlu0 %v1726, 109
        %v1732 = vpop.permute.xlu0 %1731
        %v1733 = vsel %vm673, %v1728, %v1730
        %v1734 = vsel %vm673, %v1730, %v1732
        %v1736 = vsel %vm978, %v1716, 0
        %v1738 = vsel %vm947, %v1733, 0
        %v1740 = vsel %vm947, %v1734, 0
        %v1742 = vsel %vm947, %v1732, 0
        %1744 = vmatpush.msra.mxu0 0.0
        %1745 = vmatpush.msra.mxu0 0.0
        %1746 = vmatpush.msra.mxu0 0.0
        %1747 = vmatpush.msra.mxu0 0.0
        %1748 = vmatpush.msra.mxu0 0.0
        %1749 = vmatpush.msra.mxu0 0.0
        %1750 = vmatpush.msra.mxu0 0.0
        %1751 = vmatpush.msra.mxu0 0.0
        %1752 = vmatpush.msra.mxu0 0.0
        %1753 = vmatpush.msra.mxu0 0.0
        %1754 = vmatpush.msra.mxu0 0.0
        %1755 = vmatpush.msra.mxu0 0.0
        %1756 = vmatpush.msra.mxu0 0.0
        %1757 = vmatpush.msra.mxu0 0.0
        %1758 = vmatpush.msra.mxu0 0.0
        %1759 = vmatpush.msra.mxu0 %v1738
        %1760 = vmatmul.bf16.gmra.mxu0 %v1736
        %v1761 = vpop.f32.mrf.mxu0
        %v1762 = vadd.f32 0.0, %v1761
        %v1763 = vpop.f32.mrf.mxu0
        %1764 = vdwg.mxu0
        %1765 = vmatpush.msra.mxu0 0.0
        %1766 = vmatpush.msra.mxu0 0.0
        %1767 = vmatpush.msra.mxu0 0.0
        %1768 = vmatpush.msra.mxu0 0.0
        %1769 = vmatpush.msra.mxu0 0.0
        %1770 = vmatpush.msra.mxu0 0.0
        %1771 = vmatpush.msra.mxu0 0.0
        %1772 = vmatpush.msra.mxu0 0.0
        %1773 = vmatpush.msra.mxu0 0.0
        %1774 = vmatpush.msra.mxu0 0.0
        %1775 = vmatpush.msra.mxu0 0.0
        %1776 = vmatpush.msra.mxu0 0.0
        %1777 = vmatpush.msra.mxu0 0.0
        %1778 = vmatpush.msra.mxu0 0.0
        %1779 = vmatpush.msra.mxu0 0.0
        %1780 = vmatpush.msra.mxu0 %v1740
        %1781 = vmatmul.bf16.gmra.mxu0 %v1736
        %v1782 = vpop.f32.mrf.mxu0
        %v1783 = vadd.f32 0.0, %v1782
        %v1784 = vpop.f32.mrf.mxu0
        %1785 = vdwg.mxu0
        %1786 = vmatpush.msra.mxu0 0.0
        %1787 = vmatpush.msra.mxu0 0.0
        %1788 = vmatpush.msra.mxu0 0.0
        %1789 = vmatpush.msra.mxu0 0.0
        %1790 = vmatpush.msra.mxu0 0.0
        %1791 = vmatpush.msra.mxu0 0.0
        %1792 = vmatpush.msra.mxu0 0.0
        %1793 = vmatpush.msra.mxu0 0.0
        %1794 = vmatpush.msra.mxu0 0.0
        %1795 = vmatpush.msra.mxu0 0.0
        %1796 = vmatpush.msra.mxu0 0.0
        %1797 = vmatpush.msra.mxu0 0.0
        %1798 = vmatpush.msra.mxu0 0.0
        %1799 = vmatpush.msra.mxu0 0.0
        %1800 = vmatpush.msra.mxu0 0.0
        %1801 = vmatpush.msra.mxu0 %v1742
        %1802 = vmatmul.bf16.gmra.mxu0 %v1736
        %v1803 = vpop.f32.mrf.mxu0
        %v1804 = vadd.f32 0.0, %v1803
        %v1805 = vpop.f32.mrf.mxu0
        %1806 = vdwg.mxu0
        %v1807 = vadd.f32 %v1712, %v1762
        %v1808 = vadd.f32 %v1713, %v1783
        %v1809 = vadd.f32 %v1714, %v1804
        %v1810 = vld [vmem:[%s7] sm:$0xff]
        %1812 = vset.pattern.permute.xlu0 0
        %1813 = vperm.xlu0 %1812, %v1810
        %v1814 = vpop.permute.xlu0 %1813
        %v1816 = vadd.f32 %v1807, %v1814
        %v1817 = vadd.f32 %v1808, %v1814
        %v1818 = vadd.f32 %v1809, %v1814
        %v1819 = vsub.f32 0.0, %v1816
        %v1820 = vsub.f32 0.0, %v1817
        %v1821 = vsub.f32 0.0, %v1818
        %v1822 = vmul.f32 %v1819, 1.442695
        %v1823 = vpow.pop %v1822
        %v1824 = vmul.f32 %v1820, 1.442695
        %v1825 = vpow.pop %v1824
        %v1826 = vmul.f32 %v1821, 1.442695
        %v1827 = vpow.pop %v1826
        %v1828 = vadd.f32 %v1823, 1.0
        %v1829 = vadd.f32 %v1825, 1.0
        %v1830 = vadd.f32 %v1827, 1.0
        %v1831 = vrcp.pop %v1828
        %v1832 = vrcp.pop %v1829
        %v1833 = vrcp.pop %v1830
        %v1834 = vmul.f32 %v1816, %v1831
        %v1835 = vmul.f32 %v1817, %v1832
        %v1836 = vmul.f32 %v1818, %v1833
        %1837 = vst [vmem:[%s356] sm:$0xff] %v1834
        %1838 = vst [vmem:[%s356 + $0x8] sm:$0xff] %v1835
        %1839 = vst.msk [vmem:[%s356 + $0x10] sm:$0xff] %vm523, %v1836
        %s1840 = sand.u32 %s211, 1
        %s1841 = scalar_lea.sflag [#allocation6], %s1840
        %s1842 = sand.u32 %s211, 1
        %s1843 = smul.addr %s1842, 24
        %s1844 = scalar_lea.vmem [#allocation7], %s1843
        %s1845 = sand.u32 %s237, 1
        %s1846 = scalar_lea.sflag [#allocation9], %s1845
        %s1847 = sand.u32 %s237, 1
        %s1848 = smul.addr %s1847, 24
        %s1849 = scalar_lea.vmem [#allocation8], %s1848
        // Predicated region
        $region57: #{tpu_custom_call.1} parent=51 // pred_check
          %p1850 = pneg %p221
        $region58: #{tpu_custom_call.1} parent=51 // pred_check_branch
          %1852 = sbr.rel (%p1850) target = $region60
        $region59: #{tpu_custom_call.1} parent=51 // pred_region
          %1854 = vsyncadd %s1841, 0
          %s1855 = smul.addr %s30, 3
          %s1856 = smul.addr %s1855, 8
          %s1857 = scalar_lea.hbm %s8, %s1856
          %s1859 = sshll.u32 %s1844, 4
          %s1860 = int_to_ptr.vmem [resolvable:$true] %s1859
          %s1861 = sshll.u32 %s1857, 4
          %s1862 = int_to_ptr.hbm [resolvable:$true] %s1861
          %1864 = dma.vmem_to_hbm [thread:$0]  %s1860, 384, %s1862, %s1841
        $region60: #{tpu_custom_call.1} parent=51 // pred_fallthru
          _
        // Predicated region
        $region61: #{tpu_custom_call.1} parent=51 // pred_check
          %p1865 = pneg %p247
        $region62: #{tpu_custom_call.1} parent=51 // pred_check_branch
          %1867 = sbr.rel (%p1865) target = $region64
        $region63: #{tpu_custom_call.1} parent=51 // pred_region
          %1869 = vsyncadd %s1846, 0
          %s1870 = smul.addr %s30, 6
          %s1871 = smul.addr %s1870, 4
          %s1872 = scalar_lea.hbm %s9, %s1871
          %s1873 = sshll.u32 %s1849, 4
          %s1874 = int_to_ptr.vmem [resolvable:$true] %s1873
          %s1875 = sshll.u32 %s1872, 4
          %s1876 = int_to_ptr.hbm [resolvable:$true] %s1875
          %1881 = dma.vmem_to_hbm [thread:$0]  %s1874, 384, %s1876, %s1846, 192, 192, 12
        $region64: #{tpu_custom_call.1} parent=51 // pred_fallthru
          _
      $region52: #{tpu_custom_call.1} parent=5 // pred_fallthru
        _
      %p1882 = scmp.le.s32.totalorder 2, %s25
      // Predicated region
      $region65: #{tpu_custom_call.1} parent=5 // pred_check
        %p1883 = pneg %p1882
      $region66: #{tpu_custom_call.1} parent=5 // pred_check_branch
        %1885 = sbr.rel (%p1883) target = $region68
      $region67: #{tpu_custom_call.1} parent=5 // pred_region
        %s1886 = ssub.s32 %s25, 2
        // Predicated region
        $region69: #{tpu_custom_call.1} parent=67 // pred_check
          %p1887 = pneg %p227
        $region70: #{tpu_custom_call.1} parent=67 // pred_check_branch
          %1889 = sbr.rel (%p1887) target = $region72
        $region71: #{tpu_custom_call.1} parent=67 // pred_region
          %s1890 = sand.u32 %s212, 1
          %s1891 = scalar_lea.sflag [#allocation6], %s1890
          %s1892 = sand.u32 %s212, 1
          %s1893 = smul.addr %s1892, 24
          %s1894 = scalar_lea.vmem [#allocation7], %s1893
          %1896 = dma.done %s1891, 384
        $region72: #{tpu_custom_call.1} parent=67 // pred_fallthru
          _
        // Predicated region
        $region73: #{tpu_custom_call.1} parent=67 // pred_check
          %p1897 = pneg %p253
        $region74: #{tpu_custom_call.1} parent=67 // pred_check_branch
          %1899 = sbr.rel (%p1897) target = $region76
        $region75: #{tpu_custom_call.1} parent=67 // pred_region
          %s1900 = sand.u32 %s238, 1
          %s1901 = scalar_lea.sflag [#allocation9], %s1900
          %s1902 = sand.u32 %s238, 1
          %s1903 = smul.addr %s1902, 24
          %s1904 = scalar_lea.vmem [#allocation8], %s1903
          %1906 = dma.done %s1901, 384
        $region76: #{tpu_custom_call.1} parent=67 // pred_fallthru
          _
      $region68: #{tpu_custom_call.1} parent=5 // pred_fallthru
        _
    $region6: #{tpu_custom_call.1} parent=1 // loop_footer
      %s29 = sadd.s32 1, %s25
    $region7: #{tpu_custom_call.1} parent=1 // loop_footer_branch
      %24 = sbr.rel target = $region3
    $region8: #{tpu_custom_call.1} parent=1 // loop_exit
      _
    %1907 = vsyncpa [#allocation5], 1
    %s1908 = scalar_lea.sflag [#allocation5], 1
    %1909 = vsyncpa %s1908, 1
    %1910 = vsyncpa [#allocation6], 1
    %s1911 = scalar_lea.sflag [#allocation6], 1
    %1912 = vsyncpa %s1911, 1
    %1913 = vsyncpa [#allocation9], 1
    %s1914 = scalar_lea.sflag [#allocation9], 1
    %1915 = vsyncpa %s1914, 1

</llo_original>
